<compile_context>
chip_gen: v7x
topology: tpu7x:2x2x1
jax: 0.10.0
libtpu: 0.0.40
codegen_flags: <defaults>
</compile_context>

<pallas_src>
import functools

import jax
import jax.numpy as jnp
from jax.experimental import pallas as pl
from jax.experimental.pallas import tpu as pltpu


def _round_up(x, m):
    return ((x + m - 1) // m) * m


def _textcnn_kernel(emb_ref, w_ref, b_ref, fcw_ref, fcb_ref, out_ref, *,
                    filter_sizes, seq_len, nf_pad, l_pad):
    """One batch tile per grid step; fully fused conv+bias+ReLU+maxpool+FC."""
    fs_max = max(filter_sizes)
    n = len(filter_sizes)
    bt, s_pad, e = emb_ref.shape
    ntot = n * nf_pad

    x = emb_ref[...]                                      # [Bt, S_pad, E]

    # im2col (built once per block): windows[b, p, s*E:(s+1)*E] = x[b, p+s, :]
    windows = jnp.concatenate(
        [x[:, s:s + l_pad, :] for s in range(fs_max)], axis=-1)  # [Bt, L_pad, fs_max*E]
    windows = windows.reshape(bt * l_pad, fs_max * e)

    # Single fused conv matmul on the MXU (f32 accumulation).
    acc = jnp.dot(windows, w_ref[...], preferred_element_type=jnp.float32)
    acc = acc + b_ref[...]                                # bias [1, ntot] broadcast
    acc = jnp.maximum(acc, 0.0)                           # ReLU (f32, VPU)
    acc = acc.reshape(bt, l_pad, ntot)

    # Mask out positions past each filter size's valid length L_j = S - fs_j + 1.
    # Post-ReLU values are >= 0, so masking invalid positions to 0 is exact for max.
    pos = jax.lax.broadcasted_iota(jnp.int32, (l_pad, ntot), 0)
    col = jax.lax.broadcasted_iota(jnp.int32, (l_pad, ntot), 1)
    thr = jnp.zeros((l_pad, ntot), jnp.int32)
    for j, fs in enumerate(filter_sizes):
        in_group = (col >= j * nf_pad) & (col < (j + 1) * nf_pad)
        thr = jnp.where(in_group, seq_len - fs + 1, thr)
    valid = (pos < thr).astype(jnp.float32)               # [L_pad, ntot]
    acc = acc * valid[None, :, :]

    pooled = jnp.max(acc, axis=1)                         # [Bt, ntot] max-over-time

    # TODO(synk): dropout is identity here (inference mode); training-mode RNG
    #             dropout could use pltpu.prng_random_bits if needed.
    out = jnp.dot(pooled.astype(fcw_ref.dtype), fcw_ref[...],
                  preferred_element_type=jnp.float32) + fcb_ref[...]
    out_ref[...] = out.astype(out_ref.dtype)


def textcnn_forward(text, emb_table, conv_ws, conv_bs, fc_w, fc_b, filter_sizes,
                    *, batch_tile=8, compute_dtype=jnp.float32):
    B, S = text.shape
    E = emb_table.shape[1]
    NF = conv_ws[0].shape[2]
    O = fc_w.shape[1]
    n = len(filter_sizes)
    fs_max = max(filter_sizes)
    fs_min = min(filter_sizes)

    # Lane-dense padding of channel axes.
    NFp = _round_up(NF, 128)
    Op = _round_up(O, 128)
    NTOT = n * NFp

    # Sequence / position padding so one fused matmul covers every filter size.
    L_all = S - fs_min + 1                 # longest valid-position count
    L_pad = _round_up(L_all, 8)            # sublane-friendly M factor
    S_pad = L_pad + fs_max - 1

    Bt = batch_tile
    B_pad = _round_up(B, Bt)

    # Embedding lookup (gather) is glue, done in plain JAX.
    embedded = emb_table[text].astype(jnp.float32)        # [B, S, E]
    emb = jnp.zeros((B_pad, S_pad, E), jnp.float32)
    emb = emb.at[:B, :S, :].set(embedded).astype(compute_dtype)

    # Fused, zero-padded conv weight bank: [fs_max*E, n*NFp].
    w_all = jnp.zeros((fs_max, E, NTOT), jnp.float32)
    b_all = jnp.zeros((1, NTOT), jnp.float32)
    for j, (fs, w, bia) in enumerate(zip(filter_sizes, conv_ws, conv_bs)):
        w_all = w_all.at[:fs, :, j * NFp:j * NFp + NF].set(w)
        b_all = b_all.at[:, j * NFp:j * NFp + NF].set(bia.reshape(1, NF))
    w_all = w_all.reshape(fs_max * E, NTOT).astype(compute_dtype)

    # FC weights remapped to the padded channel layout (zero rows/cols are inert).
    fcw_p = jnp.zeros((NTOT, Op), jnp.float32)
    for j in range(n):
        fcw_p = fcw_p.at[j * NFp:j * NFp + NF, :O].set(fc_w[j * NF:(j + 1) * NF, :])
    fcw_p = fcw_p.astype(compute_dtype)
    fcb_p = jnp.zeros((1, Op), jnp.float32).at[:, :O].set(fc_b.reshape(1, O))

    kernel = functools.partial(
        _textcnn_kernel,
        filter_sizes=tuple(filter_sizes), seq_len=S, nf_pad=NFp, l_pad=L_pad)

    out = pl.pallas_call(
        kernel,
        out_shape=jax.ShapeDtypeStruct((B_pad, Op), jnp.float32),
        grid=(B_pad // Bt,),
        in_specs=[
            pl.BlockSpec((Bt, S_pad, E), lambda b: (b, 0, 0)),
            pl.BlockSpec((fs_max * E, NTOT), lambda b: (0, 0)),
            pl.BlockSpec((1, NTOT), lambda b: (0, 0)),
            pl.BlockSpec((NTOT, Op), lambda b: (0, 0)),
            pl.BlockSpec((1, Op), lambda b: (0, 0)),
        ],
        out_specs=pl.BlockSpec((Bt, Op), lambda b: (b, 0)),
        compiler_params=pltpu.CompilerParams(dimension_semantics=("parallel",)),
    )(emb, w_all, b_all, fcw_p, fcb_p)

    return out[:B, :O]


def textcnn_reference(text, emb_table, conv_ws, conv_bs, fc_w, fc_b, filter_sizes):
    """Pure-JAX f32 reference of the PyTorch forward (dropout = identity)."""
    B, S = text.shape
    emb = emb_table[text].astype(jnp.float32)  # [B, S, E]
    pooled = []
    for fs, w, bia in zip(filter_sizes, conv_ws, conv_bs):
        L = S - fs + 1
        windows = jnp.stack([emb[:, s:s + L, :] for s in range(fs)], axis=2)  # [B,L,fs,E]
        conv = jnp.einsum('blse,sef->blf', windows, w) + bia                  # [B,L,NF]
        conv = jnp.maximum(conv, 0.0)
        pooled.append(jnp.max(conv, axis=1))                                  # [B,NF]
    cat = jnp.concatenate(pooled, axis=1)
    return cat @ fc_w + fc_b


if __name__ == "__main__":
    # Small, module-consistent shapes.
    vocab_size = 50
    embedding_dim = 32
    n_filters = 8
    filter_sizes = [3, 4, 5]
    output_dim = 4
    pad_idx = 0
    batch, seq = 16, 16     # 2 batch tiles of 8 -> 2 grid steps (both TCs on v7x)

    key = jax.random.PRNGKey(0)
    k_emb, k_txt, k_fcw, k_fcb, *k_convs = jax.random.split(key, 4 + 2 * len(filter_sizes))

    # Deterministic parameter init (synthetic weights, PyTorch-equivalent shapes).
    emb_table = 0.1 * jax.random.normal(k_emb, (vocab_size, embedding_dim), jnp.float32)
    emb_table = emb_table.at[pad_idx].set(0.0)  # padding_idx row zeroed

    conv_ws, conv_bs = [], []
    for i, fs in enumerate(filter_sizes):
        kw, kb = k_convs[2 * i], k_convs[2 * i + 1]
        # PyTorch conv weight [NF, 1, fs, E]  ->  ours [fs, E, NF]
        conv_ws.append(0.1 * jax.random.normal(kw, (fs, embedding_dim, n_filters), jnp.float32))
        conv_bs.append(0.1 * jax.random.normal(kb, (1, n_filters), jnp.float32))

    # PyTorch fc weight [O, len(fs)*NF]  ->  ours [len(fs)*NF, O]
    fc_w = 0.1 * jax.random.normal(k_fcw, (len(filter_sizes) * n_filters, output_dim), jnp.float32)
    fc_b = 0.1 * jax.random.normal(k_fcb, (1, output_dim), jnp.float32)

    text = jax.random.randint(k_txt, (batch, seq), 0, vocab_size, dtype=jnp.int32)

    ref = textcnn_reference(text, emb_table, conv_ws, conv_bs, fc_w, fc_b, filter_sizes)

    # f32 path (tight check).
    out_f32 = textcnn_forward(text, emb_table, conv_ws, conv_bs, fc_w, fc_b,
                              filter_sizes, batch_tile=8, compute_dtype=jnp.float32)
    out_f32 = jax.block_until_ready(out_f32)
    assert out_f32.shape == (batch, output_dim)
    assert jnp.allclose(out_f32, ref, rtol=1e-4, atol=1e-4), (out_f32, ref)

    # bf16-input path (v6e/v7x MXU rate; f32 accumulation) -> looser tolerance.
    out_bf16 = textcnn_forward(text, emb_table, conv_ws, conv_bs, fc_w, fc_b,
                               filter_sizes, batch_tile=8, compute_dtype=jnp.bfloat16)
    out_bf16 = jax.block_until_ready(out_bf16)
    assert out_bf16.shape == (batch, output_dim)
    assert jnp.allclose(out_bf16, ref, rtol=2e-2, atol=2e-2), (out_bf16, ref)

    print("KERNEL_OK")
</pallas_src>

<mosaic_0001>
module attributes {stable_mosaic.version = 11 : i64} {
  func.func @_textcnn_kernel(%arg0: i32, %arg1: memref<8x20x32xf32, #tpu.memory_space<vmem>>, %arg2: memref<160x384xf32, #tpu.memory_space<vmem>>, %arg3: memref<1x384xf32, #tpu.memory_space<vmem>>, %arg4: memref<384x128xf32, #tpu.memory_space<vmem>>, %arg5: memref<1x128xf32, #tpu.memory_space<vmem>>, %arg6: memref<8x128xf32, #tpu.memory_space<vmem>>) attributes {dimension_semantics = [#tpu.dimension_semantics<parallel>], iteration_bounds = array<i64: 2>, scalar_prefetch = 0 : i64, scratch_operands = 0 : i64, tpu.core_type = #tpu.core_type<tc>, window_params = [{transform_indices = @transform_0, window_bounds = array<i64: 8, 20, 32>}, {pipeline_mode = #tpu.pipeline_mode<synchronous>, transform_indices = @transform_1, window_bounds = array<i64: 160, 384>}, {pipeline_mode = #tpu.pipeline_mode<synchronous>, transform_indices = @transform_2, window_bounds = array<i64: 1, 384>}, {pipeline_mode = #tpu.pipeline_mode<synchronous>, transform_indices = @transform_3, window_bounds = array<i64: 384, 128>}, {pipeline_mode = #tpu.pipeline_mode<synchronous>, transform_indices = @transform_4, window_bounds = array<i64: 1, 128>}, {transform_indices = @transform_5, window_bounds = array<i64: 8, 128>}]} {
    %c0 = arith.constant 0 : index
    %c0_0 = arith.constant 0 : index
    %c0_1 = arith.constant 0 : index
    %0 = vector.load %arg1[%c0, %c0_0, %c0_1] : memref<8x20x32xf32, #tpu.memory_space<vmem>>, vector<8x20x32xf32>
    %1 = vector.extract_strided_slice %0 {offsets = [0, 0, 0], sizes = [8, 16, 32], strides = [1, 1, 1]} : vector<8x20x32xf32> to vector<8x16x32xf32>
    %2 = vector.extract_strided_slice %0 {offsets = [0, 1, 0], sizes = [8, 16, 32], strides = [1, 1, 1]} : vector<8x20x32xf32> to vector<8x16x32xf32>
    %3 = vector.extract_strided_slice %0 {offsets = [0, 2, 0], sizes = [8, 16, 32], strides = [1, 1, 1]} : vector<8x20x32xf32> to vector<8x16x32xf32>
    %4 = vector.extract_strided_slice %0 {offsets = [0, 3, 0], sizes = [8, 16, 32], strides = [1, 1, 1]} : vector<8x20x32xf32> to vector<8x16x32xf32>
    %5 = vector.extract_strided_slice %0 {offsets = [0, 4, 0], sizes = [8, 16, 32], strides = [1, 1, 1]} : vector<8x20x32xf32> to vector<8x16x32xf32>
    %6 = tpu.concatenate %1, %2, %3, %4, %5 in 2 : vector<8x16x32xf32>, vector<8x16x32xf32>, vector<8x16x32xf32>, vector<8x16x32xf32>, vector<8x16x32xf32> -> vector<8x16x160xf32>
    %7 = vector.shape_cast %6 : vector<8x16x160xf32> to vector<128x160xf32>
    %c0_2 = arith.constant 0 : index
    %c0_3 = arith.constant 0 : index
    %8 = vector.load %arg2[%c0_2, %c0_3] : memref<160x384xf32, #tpu.memory_space<vmem>>, vector<160x384xf32>
    %cst = arith.constant dense<0.000000e+00> : vector<128x384xf32>
    %9 = tpu.matmul %7, %8, %cst {dimension_numbers = #tpu.dot_dimension_numbers<[1], [0], [0], [1], [0, 0, 1, 1], [], []>} : vector<128x160xf32>, vector<160x384xf32>, vector<128x384xf32> -> vector<128x384xf32>
    %c0_4 = arith.constant 0 : index
    %c0_5 = arith.constant 0 : index
    %10 = vector.load %arg3[%c0_4, %c0_5] : memref<1x384xf32, #tpu.memory_space<vmem>>, vector<1x384xf32>
    %11 = vector.broadcast %10 : vector<1x384xf32> to vector<128x384xf32>
    %12 = arith.addf %9, %11 : vector<128x384xf32>
    %cst_6 = arith.constant 0.000000e+00 : f32
    %13 = vector.broadcast %cst_6 : f32 to vector<128x384xf32>
    %14 = arith.maximumf %12, %13 : vector<128x384xf32>
    %15 = vector.shape_cast %14 : vector<128x384xf32> to vector<8x16x384xf32>
    %16 = tpu.iota {dimensions = array<i32: 0>} : vector<16x384xi32>
    %17 = tpu.iota {dimensions = array<i32: 1>} : vector<16x384xi32>
    %c0_i32 = arith.constant 0 : i32
    %18 = vector.broadcast %c0_i32 : i32 to vector<16x384xi32>
    %c0_i32_7 = arith.constant 0 : i32
    %19 = vector.broadcast %c0_i32_7 : i32 to vector<16x384xi32>
    %20 = arith.cmpi sge, %17, %19 : vector<16x384xi32>
    %c128_i32 = arith.constant 128 : i32
    %21 = vector.broadcast %c128_i32 : i32 to vector<16x384xi32>
    %22 = arith.cmpi slt, %17, %21 : vector<16x384xi32>
    %23 = arith.andi %20, %22 : vector<16x384xi1>
    %c14_i32 = arith.constant 14 : i32
    %24 = vector.broadcast %c14_i32 : i32 to vector<16x384xi32>
    %25 = arith.select %23, %24, %18 : vector<16x384xi1>, vector<16x384xi32>
    %c128_i32_8 = arith.constant 128 : i32
    %26 = vector.broadcast %c128_i32_8 : i32 to vector<16x384xi32>
    %27 = arith.cmpi sge, %17, %26 : vector<16x384xi32>
    %c256_i32 = arith.constant 256 : i32
    %28 = vector.broadcast %c256_i32 : i32 to vector<16x384xi32>
    %29 = arith.cmpi slt, %17, %28 : vector<16x384xi32>
    %30 = arith.andi %27, %29 : vector<16x384xi1>
    %c13_i32 = arith.constant 13 : i32
    %31 = vector.broadcast %c13_i32 : i32 to vector<16x384xi32>
    %32 = arith.select %30, %31, %25 : vector<16x384xi1>, vector<16x384xi32>
    %c256_i32_9 = arith.constant 256 : i32
    %33 = vector.broadcast %c256_i32_9 : i32 to vector<16x384xi32>
    %34 = arith.cmpi sge, %17, %33 : vector<16x384xi32>
    %c384_i32 = arith.constant 384 : i32
    %35 = vector.broadcast %c384_i32 : i32 to vector<16x384xi32>
    %36 = arith.cmpi slt, %17, %35 : vector<16x384xi32>
    %37 = arith.andi %34, %36 : vector<16x384xi1>
    %c12_i32 = arith.constant 12 : i32
    %38 = vector.broadcast %c12_i32 : i32 to vector<16x384xi32>
    %39 = arith.select %37, %38, %32 : vector<16x384xi1>, vector<16x384xi32>
    %40 = arith.cmpi slt, %16, %39 : vector<16x384xi32>
    %41 = arith.extui %40 : vector<16x384xi1> to vector<16x384xi32>
    %42 = arith.sitofp %41 : vector<16x384xi32> to vector<16x384xf32>
    %43 = vector.shape_cast %42 : vector<16x384xf32> to vector<1x16x384xf32>
    %44 = vector.broadcast %43 : vector<1x16x384xf32> to vector<8x16x384xf32>
    %45 = arith.mulf %15, %44 : vector<8x16x384xf32>
    %cst_10 = arith.constant dense<0xFF800000> : vector<8x384xf32>
    %46 = vector.multi_reduction <maximumf>, %45, %cst_10 [1] : vector<8x16x384xf32> to vector<8x384xf32>
    %c0_11 = arith.constant 0 : index
    %c0_12 = arith.constant 0 : index
    %47 = vector.load %arg4[%c0_11, %c0_12] : memref<384x128xf32, #tpu.memory_space<vmem>>, vector<384x128xf32>
    %cst_13 = arith.constant dense<0.000000e+00> : vector<8x128xf32>
    %48 = tpu.matmul %46, %47, %cst_13 {dimension_numbers = #tpu.dot_dimension_numbers<[1], [0], [0], [1], [0, 0, 1, 1], [], []>} : vector<8x384xf32>, vector<384x128xf32>, vector<8x128xf32> -> vector<8x128xf32>
    %c0_14 = arith.constant 0 : index
    %c0_15 = arith.constant 0 : index
    %49 = vector.load %arg5[%c0_14, %c0_15] : memref<1x128xf32, #tpu.memory_space<vmem>>, vector<1x128xf32>
    %50 = vector.broadcast %49 : vector<1x128xf32> to vector<8x128xf32>
    %51 = arith.addf %48, %50 : vector<8x128xf32>
    %c0_16 = arith.constant 0 : index
    %c0_17 = arith.constant 0 : index
    %52 = vector.load %arg6[%c0_16, %c0_17] : memref<8x128xf32, #tpu.memory_space<vmem>>, vector<8x128xf32>
    tpu.vector_store %arg6[%c0_16, %c0_17], %51 {strides = array<i32>} : memref<8x128xf32, #tpu.memory_space<vmem>>, vector<8x128xf32>,
    return
  }
  func.func @transform_0(%arg0: i32) -> (i32, i32, i32) {
    %c0_i32 = arith.constant 0 : i32
    %c0_i32_0 = arith.constant 0 : i32
    %c0_i32_1 = arith.constant 0 : i32
    return %arg0, %c0_i32, %c0_i32_0 : i32, i32, i32
  }
  func.func @transform_1(%arg0: i32) -> (i32, i32) {
    %c0_i32 = arith.constant 0 : i32
    %c0_i32_0 = arith.constant 0 : i32
    %c0_i32_1 = arith.constant 0 : i32
    return %c0_i32, %c0_i32_0 : i32, i32
  }
  func.func @transform_2(%arg0: i32) -> (i32, i32) {
    %c0_i32 = arith.constant 0 : i32
    %c0_i32_0 = arith.constant 0 : i32
    %c0_i32_1 = arith.constant 0 : i32
    return %c0_i32, %c0_i32_0 : i32, i32
  }
  func.func @transform_3(%arg0: i32) -> (i32, i32) {
    %c0_i32 = arith.constant 0 : i32
    %c0_i32_0 = arith.constant 0 : i32
    %c0_i32_1 = arith.constant 0 : i32
    return %c0_i32, %c0_i32_0 : i32, i32
  }
  func.func @transform_4(%arg0: i32) -> (i32, i32) {
    %c0_i32 = arith.constant 0 : i32
    %c0_i32_0 = arith.constant 0 : i32
    %c0_i32_1 = arith.constant 0 : i32
    return %c0_i32, %c0_i32_0 : i32, i32
  }
  func.func @transform_5(%arg0: i32) -> (i32, i32) {
    %c0_i32 = arith.constant 0 : i32
    %c0_i32_0 = arith.constant 0 : i32
    return %arg0, %c0_i32 : i32, i32
  }
}

</mosaic_0001>

<llo_original>
// kernel: tpu_custom_call.1
$region0: #{tpu_custom_call.1}
  #allocation0 [shape = 'u32[]', space=smem, size = 0x4, offset = 0x4, fixed_abs, tag = 'smem constant byte address 0x4 - core index']
  #allocation1 [shape = 'u32[144,128]{1,0:T(1,128)}', space=vmem, size = 0x12000, scoped, tag = 'internal scratch']
  %s0 = inlined_call_operand.vmem [shape: f32[16,20,32], index: 0, kind: input, shape index: {}]
  %s1 = inlined_call_operand.vmem [shape: f32[160,384], index: 1, kind: input, shape index: {}]
  %s2 = inlined_call_operand.vmem [shape: f32[1,384], index: 2, kind: input, shape index: {}]
  %s3 = inlined_call_operand.hbm [shape: f32[384,128], index: 3, kind: input, shape index: {}]
  %s4 = inlined_call_operand.vmem [shape: f32[1,128], index: 4, kind: input, shape index: {}]
  %s5 = inlined_call_operand.hbm [shape: f32[16,128], index: 5, kind: output, shape index: {}]
  %s6 = sld [smem:[#allocation0]]
  $region57: #{tpu_custom_call.1} parent=0
    _
  %s8 = ssub.s32 1, %s6
  %s9 = scalar_select 0, %s8, %s6
  $region1: #{tpu_custom_call.1} parent=0
    #allocation2 [shape = 'u8[196608]{0}', space=vmem, size = 0x30000, scoped, tag = 'input window, operand 3, single buffered']
    #allocation3 [shape = 's32[2]{0}', space=sflag, size = 0x8, scoped, tag = 'scoped memory for tpu_custom_call.1']
    #allocation4 [shape = 's32[2]{0}', space=sflag, size = 0x8, scoped, tag = 'scoped memory for tpu_custom_call.1']
    #allocation5 [shape = 'u8[8192]{0}', space=vmem, size = 0x2000, scoped, tag = 'output window, operand 0']
    %10 = vsyncpa [#allocation3], 0
    %11 = vsyncpa [#allocation4], 0
    %s12 = scalar_lea.sflag [#allocation4], 1
    %13 = vsyncpa %s12, 0
    loop: start=0, step=1, limit=4
    $region2: #{tpu_custom_call.1} parent=1 // loop_pre_header
      _
    $region3: #{tpu_custom_call.1} parent=1 // loop_header
      %s15 = sphi 0, %s19
      %p16 = scmp.ge.s32.totalorder %s15, 4
      %s25 = sphi 0, %s27
      %s28 = sphi 0, %s25
      %s29 = sphi 0, %s28
      %s45 = sphi 0, %s29
      %s49 = sphi 0, %s49
      %s51 = sphi 0, %s49
      %s52 = sphi 0, %s51
      %s66 = sphi 0, %s52
      %s70 = sphi 0, %s70
      %s72 = sphi 0, %s70
      %s73 = sphi 0, %s72
      %s87 = sphi 0, %s73
      %s91 = sphi 0, %s91
      %s93 = sphi 0, %s91
      %s94 = sphi 0, %s93
      %s108 = sphi 0, %s94
      %s112 = sphi 0, %s112
      %s114 = sphi 0, %s112
      %s115 = sphi 0, %s114
      %s129 = sphi 0, %s115
      %s135 = sphi 0, %s137
      %s138 = sphi 0, %s135
      %s139 = sphi 0, %s138
      %s155 = sphi 0, %s139
    $region4: #{tpu_custom_call.1} parent=1 // loop_header_branch
      %18 = sbr.rel (%p16) target = $region8
    $region5: #{tpu_custom_call.1} parent=1 // loop_body
      %s20 = ssub.s32 %s15, 1
      %s21 = ssub.s32 %s15, 2
      %s22 = sadd.s32 %s15, 1
      %s23 = ssub.s32 %s15, %s22
      %p24 = scmp.eq.s32.totalorder %s23, 0
      %s26 = sadd.s32 %s25, 1
      %s27 = scalar_select %p24, %s25, %s26
      %p30 = pneg %p24
      %p31 = scmp.eq.s32.totalorder %s15, 1
      %p32 = por %p30, %p31
      %p33 = scmp.ne.s32.totalorder %s25, %s28
      %p34 = scmp.eq.s32.totalorder %s15, 0
      %p35 = por %p33, %p34
      %p36 = scmp.ne.s32.totalorder %s25, %s28
      %p37 = scmp.eq.s32.totalorder %s20, 1
      %p38 = por %p36, %p37
      %p39 = scmp.ne.s32.totalorder %s28, %s29
      %p40 = scmp.eq.s32.totalorder %s20, 0
      %p41 = por %p39, %p40
      %p42 = scmp.ne.s32.totalorder %s28, %s29
      %p43 = scmp.eq.s32.totalorder %s21, 1
      %p44 = por %p42, %p43
      %p46 = scmp.ne.s32.totalorder %s29, %s45
      %p47 = scmp.eq.s32.totalorder %s21, 0
      %p48 = por %p46, %p47
      %s50 = sadd.s32 %s49, 1
      %p53 = scmp.eq.s32.totalorder %s15, 1
      %p54 = scmp.ne.s32.totalorder %s49, %s51
      %p55 = scmp.eq.s32.totalorder %s15, 0
      %p56 = por %p54, %p55
      %p57 = scmp.ne.s32.totalorder %s49, %s51
      %p58 = scmp.eq.s32.totalorder %s20, 1
      %p59 = por %p57, %p58
      %p60 = scmp.ne.s32.totalorder %s51, %s52
      %p61 = scmp.eq.s32.totalorder %s20, 0
      %p62 = por %p60, %p61
      %p63 = scmp.ne.s32.totalorder %s51, %s52
      %p64 = scmp.eq.s32.totalorder %s21, 1
      %p65 = por %p63, %p64
      %p67 = scmp.ne.s32.totalorder %s52, %s66
      %p68 = scmp.eq.s32.totalorder %s21, 0
      %p69 = por %p67, %p68
      %s71 = sadd.s32 %s70, 1
      %p74 = scmp.eq.s32.totalorder %s15, 1
      %p75 = scmp.ne.s32.totalorder %s70, %s72
      %p76 = scmp.eq.s32.totalorder %s15, 0
      %p77 = por %p75, %p76
      %p78 = scmp.ne.s32.totalorder %s70, %s72
      %p79 = scmp.eq.s32.totalorder %s20, 1
      %p80 = por %p78, %p79
      %p81 = scmp.ne.s32.totalorder %s72, %s73
      %p82 = scmp.eq.s32.totalorder %s20, 0
      %p83 = por %p81, %p82
      %p84 = scmp.ne.s32.totalorder %s72, %s73
      %p85 = scmp.eq.s32.totalorder %s21, 1
      %p86 = por %p84, %p85
      %p88 = scmp.ne.s32.totalorder %s73, %s87
      %p89 = scmp.eq.s32.totalorder %s21, 0
      %p90 = por %p88, %p89
      %s92 = sadd.s32 %s91, 1
      %p95 = scmp.eq.s32.totalorder %s15, 1
      %p96 = scmp.ne.s32.totalorder %s91, %s93
      %p97 = scmp.eq.s32.totalorder %s15, 0
      %p98 = por %p96, %p97
      %p99 = scmp.ne.s32.totalorder %s91, %s93
      %p100 = scmp.eq.s32.totalorder %s20, 1
      %p101 = por %p99, %p100
      %p102 = scmp.ne.s32.totalorder %s93, %s94
      %p103 = scmp.eq.s32.totalorder %s20, 0
      %p104 = por %p102, %p103
      %p105 = scmp.ne.s32.totalorder %s93, %s94
      %p106 = scmp.eq.s32.totalorder %s21, 1
      %p107 = por %p105, %p106
      %p109 = scmp.ne.s32.totalorder %s94, %s108
      %p110 = scmp.eq.s32.totalorder %s21, 0
      %p111 = por %p109, %p110
      %s113 = sadd.s32 %s112, 1
      %p116 = scmp.eq.s32.totalorder %s15, 1
      %p117 = scmp.ne.s32.totalorder %s112, %s114
      %p118 = scmp.eq.s32.totalorder %s15, 0
      %p119 = por %p117, %p118
      %p120 = scmp.ne.s32.totalorder %s112, %s114
      %p121 = scmp.eq.s32.totalorder %s20, 1
      %p122 = por %p120, %p121
      %p123 = scmp.ne.s32.totalorder %s114, %s115
      %p124 = scmp.eq.s32.totalorder %s20, 0
      %p125 = por %p123, %p124
      %p126 = scmp.ne.s32.totalorder %s114, %s115
      %p127 = scmp.eq.s32.totalorder %s21, 1
      %p128 = por %p126, %p127
      %p130 = scmp.ne.s32.totalorder %s115, %s129
      %p131 = scmp.eq.s32.totalorder %s21, 0
      %p132 = por %p130, %p131
      %s133 = ssub.s32 %s15, %s22
      %p134 = scmp.eq.s32.totalorder %s133, 0
      %s136 = sadd.s32 %s135, 1
      %s137 = scalar_select %p134, %s135, %s136
      %p140 = pneg %p134
      %p141 = scmp.eq.s32.totalorder %s15, 1
      %p142 = por %p140, %p141
      %p143 = scmp.ne.s32.totalorder %s135, %s138
      %p144 = scmp.eq.s32.totalorder %s15, 0
      %p145 = por %p143, %p144
      %p146 = scmp.ne.s32.totalorder %s135, %s138
      %p147 = scmp.eq.s32.totalorder %s20, 1
      %p148 = por %p146, %p147
      %p149 = scmp.ne.s32.totalorder %s138, %s139
      %p150 = scmp.eq.s32.totalorder %s20, 0
      %p151 = por %p149, %p150
      %p152 = scmp.ne.s32.totalorder %s138, %s139
      %p153 = scmp.eq.s32.totalorder %s21, 1
      %p154 = por %p152, %p153
      %p156 = scmp.ne.s32.totalorder %s139, %s155
      %p157 = scmp.eq.s32.totalorder %s21, 0
      %p158 = por %p156, %p157
      %p159 = scmp.le.s32.totalorder 1, %s15
      %p160 = scmp.lt.s32.totalorder %s15, 3
      %p161 = pnand %p159, %p160
      %p162 = pneg %p161
      // Predicated region
      $region9: #{tpu_custom_call.1} parent=5 // pred_check
        _
      $region10: #{tpu_custom_call.1} parent=5 // pred_check_branch
        %164 = sbr.rel (%p161) target = $region12
      $region11: #{tpu_custom_call.1} parent=5 // pred_region
        %s165 = ssub.s32 %s15, 1
        // Predicated region
        $region13: #{tpu_custom_call.1} parent=11 // pred_check
          %p166 = pneg %p62
        $region14: #{tpu_custom_call.1} parent=11 // pred_check_branch
          %168 = sbr.rel (%p166) target = $region16
        $region15: #{tpu_custom_call.1} parent=11 // pred_region
          _
        $region16: #{tpu_custom_call.1} parent=11 // pred_fallthru
          _
        // Predicated region
        $region17: #{tpu_custom_call.1} parent=11 // pred_check
          %p169 = pneg %p83
        $region18: #{tpu_custom_call.1} parent=11 // pred_check_branch
          %171 = sbr.rel (%p169) target = $region20
        $region19: #{tpu_custom_call.1} parent=11 // pred_region
          _
        $region20: #{tpu_custom_call.1} parent=11 // pred_fallthru
          _
        // Predicated region
        $region21: #{tpu_custom_call.1} parent=11 // pred_check
          %p172 = pneg %p104
        $region22: #{tpu_custom_call.1} parent=11 // pred_check_branch
          %174 = sbr.rel (%p172) target = $region24
        $region23: #{tpu_custom_call.1} parent=11 // pred_region
          %s176 = ssub.s32 6144, 6144
          %177 = vsyncadd [#allocation3], %s176
          %s178 = sshll.u32 [#allocation2], 4
          %s179 = int_to_ptr.vmem [resolvable:$true] %s178
          %184 = dma.hbm_to_vmem [thread:$0]  %s3, 6144, %s179, [#allocation3], 128, 128, 8
        $region24: #{tpu_custom_call.1} parent=11 // pred_fallthru
          _
        // Predicated region
        $region25: #{tpu_custom_call.1} parent=11 // pred_check
          %p185 = pneg %p125
        $region26: #{tpu_custom_call.1} parent=11 // pred_check_branch
          %187 = sbr.rel (%p185) target = $region28
        $region27: #{tpu_custom_call.1} parent=11 // pred_region
          _
        $region28: #{tpu_custom_call.1} parent=11 // pred_fallthru
          _
      $region12: #{tpu_custom_call.1} parent=5 // pred_fallthru
        _
      %p188 = scmp.lt.s32.totalorder %s15, 2
      // Predicated region
      $region29: #{tpu_custom_call.1} parent=5 // pred_check
        %p189 = pneg %p188
      $region30: #{tpu_custom_call.1} parent=5 // pred_check_branch
        %191 = sbr.rel (%p189) target = $region32
      $region31: #{tpu_custom_call.1} parent=5 // pred_region
        // Predicated region
        $region33: #{tpu_custom_call.1} parent=31 // pred_check
          %p192 = pneg %p35
        $region34: #{tpu_custom_call.1} parent=31 // pred_check_branch
          %194 = sbr.rel (%p192) target = $region36
        $region35: #{tpu_custom_call.1} parent=31 // pred_region
          %s195 = smul.u32 8, %s15
          %p196 = scmp.lt.s32.totalorder %s195, 15
          %s197 = scalar_select %p196, %s195, 15
          %s198 = smul.addr %s197, 3
          %s199 = smul.addr %s198, 8
          %s200 = scalar_lea.vmem %s0, %s199
          %s201 = smul.u32 8, %s15
        $region36: #{tpu_custom_call.1} parent=31 // pred_fallthru
          _
      $region32: #{tpu_custom_call.1} parent=5 // pred_fallthru
        _
      %p202 = scmp.le.s32.totalorder 1, %s15
      %p203 = scmp.lt.s32.totalorder %s15, 3
      %p204 = pnand %p202, %p203
      %p205 = pneg %p204
      // Predicated region
      $region37: #{tpu_custom_call.1} parent=5 // pred_check
        _
      $region38: #{tpu_custom_call.1} parent=5 // pred_check_branch
        %207 = sbr.rel (%p204) target = $region40
      $region39: #{tpu_custom_call.1} parent=5 // pred_region
        %s208 = ssub.s32 %s15, 1
        // Predicated region
        $region41: #{tpu_custom_call.1} parent=39 // pred_check
          %p209 = pneg %p104
        $region42: #{tpu_custom_call.1} parent=39 // pred_check_branch
          %211 = sbr.rel (%p209) target = $region44
        $region43: #{tpu_custom_call.1} parent=39 // pred_region
          %212 = dma.done [#allocation3], 6144
        $region44: #{tpu_custom_call.1} parent=39 // pred_fallthru
          _
        %s213 = smul.u32 8, %s20
        %p214 = scmp.lt.s32.totalorder %s213, 15
        %s215 = scalar_select %p214, %s213, 15
        %s216 = smul.addr %s215, 3
        %s217 = smul.addr %s216, 8
        %s218 = scalar_lea.vmem %s0, %s217
        %p219 = pneg %p41
        %p220 = pneg %p38
        %p221 = pneg %p62
        %p222 = pneg %p59
        %p223 = pneg %p83
        %p224 = pneg %p80
        %p225 = pneg %p104
        %p226 = pneg %p101
        %p227 = pneg %p125
        %p228 = pneg %p122
        %p229 = pneg %p151
        %p230 = pneg %p148
        %s231 = sand.u32 %s138, 1
        %s232 = scalar_lea.sflag [#allocation4], %s231
        %s233 = sand.u32 %s138, 1
        %s234 = smul.addr %s233, 8
        %s235 = scalar_lea.vmem [#allocation5], %s234
        %s236 = smul.u32 8, %s20
        %p237 = scmp.lt.s32.totalorder %s236, 15
        %s238 = scalar_select %p237, %s236, 15
        %s239 = smul.addr %s238, 3
        %s240 = smul.addr %s239, 8
        %s241 = scalar_lea.vmem %s0, %s240
        %s242 = smul.u32 8, %s20
        %v243 = vld [vmem:[%s241] sm:$0xff]
        %v244 = vld [vmem:[%s241 + $0x8] sm:$0xff]
        %v245 = vld [vmem:[%s241 + $0x10] sm:$0xf]
        %v246 = vld [vmem:[%s241 + $0x18] sm:$0xff]
        %v247 = vld [vmem:[%s241 + $0x20] sm:$0xff]
        %v248 = vld [vmem:[%s241 + $0x28] sm:$0xf]
        %v249 = vld [vmem:[%s241 + $0x30] sm:$0xff]
        %v250 = vld [vmem:[%s241 + $0x38] sm:$0xff]
        %v251 = vld [vmem:[%s241 + $0x40] sm:$0xf]
        %v252 = vld [vmem:[%s241 + $0x48] sm:$0xff]
        %v253 = vld [vmem:[%s241 + $0x50] sm:$0xff]
        %v254 = vld [vmem:[%s241 + $0x58] sm:$0xf]
        %v255 = vld [vmem:[%s241 + $0x60] sm:$0xff]
        %v256 = vld [vmem:[%s241 + $0x68] sm:$0xff]
        %v257 = vld [vmem:[%s241 + $0x70] sm:$0xf]
        %v258 = vld [vmem:[%s241 + $0x78] sm:$0xff]
        %v259 = vld [vmem:[%s241 + $0x80] sm:$0xff]
        %v260 = vld [vmem:[%s241 + $0x88] sm:$0xf]
        %v261 = vld [vmem:[%s241 + $0x90] sm:$0xff]
        %v262 = vld [vmem:[%s241 + $0x98] sm:$0xff]
        %v263 = vld [vmem:[%s241 + $0xa0] sm:$0xf]
        %v264 = vld [vmem:[%s241 + $0xa8] sm:$0xff]
        %v265 = vld [vmem:[%s241 + $0xb0] sm:$0xff]
        %v266 = vld [vmem:[%s241 + $0xb8] sm:$0xf]
        %vm291 = vcmask 1046528
        %v292 = vrot.slane %v243, 1
        %v293 = vrot.slane %v244, 1
        %v294 = vsel %vm291, %v292, %v293
        %v295 = vrot.slane %v245, 1
        %v296 = vsel %vm291, %v293, %v295
        %v297 = vrot.slane %v246, 1
        %v298 = vrot.slane %v247, 1
        %v299 = vsel %vm291, %v297, %v298
        %v300 = vrot.slane %v248, 1
        %v301 = vsel %vm291, %v298, %v300
        %v302 = vrot.slane %v249, 1
        %v303 = vrot.slane %v250, 1
        %v304 = vsel %vm291, %v302, %v303
        %v305 = vrot.slane %v251, 1
        %v306 = vsel %vm291, %v303, %v305
        %v307 = vrot.slane %v252, 1
        %v308 = vrot.slane %v253, 1
        %v309 = vsel %vm291, %v307, %v308
        %v310 = vrot.slane %v254, 1
        %v311 = vsel %vm291, %v308, %v310
        %v312 = vrot.slane %v255, 1
        %v313 = vrot.slane %v256, 1
        %v314 = vsel %vm291, %v312, %v313
        %v315 = vrot.slane %v257, 1
        %v316 = vsel %vm291, %v313, %v315
        %v317 = vrot.slane %v258, 1
        %v318 = vrot.slane %v259, 1
        %v319 = vsel %vm291, %v317, %v318
        %v320 = vrot.slane %v260, 1
        %v321 = vsel %vm291, %v318, %v320
        %v322 = vrot.slane %v261, 1
        %v323 = vrot.slane %v262, 1
        %v324 = vsel %vm291, %v322, %v323
        %v325 = vrot.slane %v263, 1
        %v326 = vsel %vm291, %v323, %v325
        %v327 = vrot.slane %v264, 1
        %v328 = vrot.slane %v265, 1
        %v329 = vsel %vm291, %v327, %v328
        %v330 = vrot.slane %v266, 1
        %v331 = vsel %vm291, %v328, %v330
        %332 = vrot.lane.b32.xlu0 %v294, 32
        %v333 = vpop.permute.xlu0 %332
        %334 = vrot.lane.b32.xlu0 %v296, 32
        %v335 = vpop.permute.xlu0 %334
        %336 = vrot.lane.b32.xlu0 %v299, 32
        %v337 = vpop.permute.xlu0 %336
        %338 = vrot.lane.b32.xlu0 %v301, 32
        %v339 = vpop.permute.xlu0 %338
        %340 = vrot.lane.b32.xlu0 %v304, 32
        %v341 = vpop.permute.xlu0 %340
        %342 = vrot.lane.b32.xlu0 %v306, 32
        %v343 = vpop.permute.xlu0 %342
        %344 = vrot.lane.b32.xlu0 %v309, 32
        %v345 = vpop.permute.xlu0 %344
        %346 = vrot.lane.b32.xlu0 %v311, 32
        %v347 = vpop.permute.xlu0 %346
        %348 = vrot.lane.b32.xlu0 %v314, 32
        %v349 = vpop.permute.xlu0 %348
        %350 = vrot.lane.b32.xlu0 %v316, 32
        %v351 = vpop.permute.xlu0 %350
        %352 = vrot.lane.b32.xlu0 %v319, 32
        %v353 = vpop.permute.xlu0 %352
        %354 = vrot.lane.b32.xlu0 %v321, 32
        %v355 = vpop.permute.xlu0 %354
        %356 = vrot.lane.b32.xlu0 %v324, 32
        %v357 = vpop.permute.xlu0 %356
        %358 = vrot.lane.b32.xlu0 %v326, 32
        %v359 = vpop.permute.xlu0 %358
        %360 = vrot.lane.b32.xlu0 %v329, 32
        %v361 = vpop.permute.xlu0 %360
        %362 = vrot.lane.b32.xlu0 %v331, 32
        %v363 = vpop.permute.xlu0 %362
        %vm380 = vcmask 1045504
        %v381 = vrot.slane %v243, 2
        %v382 = vrot.slane %v244, 2
        %v383 = vsel %vm380, %v381, %v382
        %v384 = vrot.slane %v245, 2
        %v385 = vsel %vm380, %v382, %v384
        %v386 = vrot.slane %v246, 2
        %v387 = vrot.slane %v247, 2
        %v388 = vsel %vm380, %v386, %v387
        %v389 = vrot.slane %v248, 2
        %v390 = vsel %vm380, %v387, %v389
        %v391 = vrot.slane %v249, 2
        %v392 = vrot.slane %v250, 2
        %v393 = vsel %vm380, %v391, %v392
        %v394 = vrot.slane %v251, 2
        %v395 = vsel %vm380, %v392, %v394
        %v396 = vrot.slane %v252, 2
        %v397 = vrot.slane %v253, 2
        %v398 = vsel %vm380, %v396, %v397
        %v399 = vrot.slane %v254, 2
        %v400 = vsel %vm380, %v397, %v399
        %v401 = vrot.slane %v255, 2
        %v402 = vrot.slane %v256, 2
        %v403 = vsel %vm380, %v401, %v402
        %v404 = vrot.slane %v257, 2
        %v405 = vsel %vm380, %v402, %v404
        %v406 = vrot.slane %v258, 2
        %v407 = vrot.slane %v259, 2
        %v408 = vsel %vm380, %v406, %v407
        %v409 = vrot.slane %v260, 2
        %v410 = vsel %vm380, %v407, %v409
        %v411 = vrot.slane %v261, 2
        %v412 = vrot.slane %v262, 2
        %v413 = vsel %vm380, %v411, %v412
        %v414 = vrot.slane %v263, 2
        %v415 = vsel %vm380, %v412, %v414
        %v416 = vrot.slane %v264, 2
        %v417 = vrot.slane %v265, 2
        %v418 = vsel %vm380, %v416, %v417
        %v419 = vrot.slane %v266, 2
        %v420 = vsel %vm380, %v417, %v419
        %421 = vrot.lane.b32.xlu0 %v383, 64
        %v422 = vpop.permute.xlu0 %421
        %423 = vrot.lane.b32.xlu0 %v385, 64
        %v424 = vpop.permute.xlu0 %423
        %425 = vrot.lane.b32.xlu0 %v388, 64
        %v426 = vpop.permute.xlu0 %425
        %427 = vrot.lane.b32.xlu0 %v390, 64
        %v428 = vpop.permute.xlu0 %427
        %429 = vrot.lane.b32.xlu0 %v393, 64
        %v430 = vpop.permute.xlu0 %429
        %431 = vrot.lane.b32.xlu0 %v395, 64
        %v432 = vpop.permute.xlu0 %431
        %433 = vrot.lane.b32.xlu0 %v398, 64
        %v434 = vpop.permute.xlu0 %433
        %435 = vrot.lane.b32.xlu0 %v400, 64
        %v436 = vpop.permute.xlu0 %435
        %437 = vrot.lane.b32.xlu0 %v403, 64
        %v438 = vpop.permute.xlu0 %437
        %439 = vrot.lane.b32.xlu0 %v405, 64
        %v440 = vpop.permute.xlu0 %439
        %441 = vrot.lane.b32.xlu0 %v408, 64
        %v442 = vpop.permute.xlu0 %441
        %443 = vrot.lane.b32.xlu0 %v410, 64
        %v444 = vpop.permute.xlu0 %443
        %445 = vrot.lane.b32.xlu0 %v413, 64
        %v446 = vpop.permute.xlu0 %445
        %447 = vrot.lane.b32.xlu0 %v415, 64
        %v448 = vpop.permute.xlu0 %447
        %449 = vrot.lane.b32.xlu0 %v418, 64
        %v450 = vpop.permute.xlu0 %449
        %451 = vrot.lane.b32.xlu0 %v420, 64
        %v452 = vpop.permute.xlu0 %451
        %vm469 = vcmask 1044480
        %v470 = vrot.slane %v243, 3
        %v471 = vrot.slane %v244, 3
        %v472 = vsel %vm469, %v470, %v471
        %v473 = vrot.slane %v245, 3
        %v474 = vsel %vm469, %v471, %v473
        %v475 = vrot.slane %v246, 3
        %v476 = vrot.slane %v247, 3
        %v477 = vsel %vm469, %v475, %v476
        %v478 = vrot.slane %v248, 3
        %v479 = vsel %vm469, %v476, %v478
        %v480 = vrot.slane %v249, 3
        %v481 = vrot.slane %v250, 3
        %v482 = vsel %vm469, %v480, %v481
        %v483 = vrot.slane %v251, 3
        %v484 = vsel %vm469, %v481, %v483
        %v485 = vrot.slane %v252, 3
        %v486 = vrot.slane %v253, 3
        %v487 = vsel %vm469, %v485, %v486
        %v488 = vrot.slane %v254, 3
        %v489 = vsel %vm469, %v486, %v488
        %v490 = vrot.slane %v255, 3
        %v491 = vrot.slane %v256, 3
        %v492 = vsel %vm469, %v490, %v491
        %v493 = vrot.slane %v257, 3
        %v494 = vsel %vm469, %v491, %v493
        %v495 = vrot.slane %v258, 3
        %v496 = vrot.slane %v259, 3
        %v497 = vsel %vm469, %v495, %v496
        %v498 = vrot.slane %v260, 3
        %v499 = vsel %vm469, %v496, %v498
        %v500 = vrot.slane %v261, 3
        %v501 = vrot.slane %v262, 3
        %v502 = vsel %vm469, %v500, %v501
        %v503 = vrot.slane %v263, 3
        %v504 = vsel %vm469, %v501, %v503
        %v505 = vrot.slane %v264, 3
        %v506 = vrot.slane %v265, 3
        %v507 = vsel %vm469, %v505, %v506
        %v508 = vrot.slane %v266, 3
        %v509 = vsel %vm469, %v506, %v508
        %510 = vrot.lane.b32.xlu0 %v472, 96
        %v511 = vpop.permute.xlu0 %510
        %512 = vrot.lane.b32.xlu0 %v474, 96
        %v513 = vpop.permute.xlu0 %512
        %514 = vrot.lane.b32.xlu0 %v477, 96
        %v515 = vpop.permute.xlu0 %514
        %516 = vrot.lane.b32.xlu0 %v479, 96
        %v517 = vpop.permute.xlu0 %516
        %518 = vrot.lane.b32.xlu0 %v482, 96
        %v519 = vpop.permute.xlu0 %518
        %520 = vrot.lane.b32.xlu0 %v484, 96
        %v521 = vpop.permute.xlu0 %520
        %522 = vrot.lane.b32.xlu0 %v487, 96
        %v523 = vpop.permute.xlu0 %522
        %524 = vrot.lane.b32.xlu0 %v489, 96
        %v525 = vpop.permute.xlu0 %524
        %526 = vrot.lane.b32.xlu0 %v492, 96
        %v527 = vpop.permute.xlu0 %526
        %528 = vrot.lane.b32.xlu0 %v494, 96
        %v529 = vpop.permute.xlu0 %528
        %530 = vrot.lane.b32.xlu0 %v497, 96
        %v531 = vpop.permute.xlu0 %530
        %532 = vrot.lane.b32.xlu0 %v499, 96
        %v533 = vpop.permute.xlu0 %532
        %534 = vrot.lane.b32.xlu0 %v502, 96
        %v535 = vpop.permute.xlu0 %534
        %536 = vrot.lane.b32.xlu0 %v504, 96
        %v537 = vpop.permute.xlu0 %536
        %538 = vrot.lane.b32.xlu0 %v507, 96
        %v539 = vpop.permute.xlu0 %538
        %540 = vrot.lane.b32.xlu0 %v509, 96
        %v541 = vpop.permute.xlu0 %540
        %vm558 = vcmask 1043456
        %v559 = vrot.slane %v243, 4
        %v560 = vrot.slane %v244, 4
        %v561 = vsel %vm558, %v559, %v560
        %v562 = vrot.slane %v245, 4
        %v563 = vsel %vm558, %v560, %v562
        %v564 = vrot.slane %v246, 4
        %v565 = vrot.slane %v247, 4
        %v566 = vsel %vm558, %v564, %v565
        %v567 = vrot.slane %v248, 4
        %v568 = vsel %vm558, %v565, %v567
        %v569 = vrot.slane %v249, 4
        %v570 = vrot.slane %v250, 4
        %v571 = vsel %vm558, %v569, %v570
        %v572 = vrot.slane %v251, 4
        %v573 = vsel %vm558, %v570, %v572
        %v574 = vrot.slane %v252, 4
        %v575 = vrot.slane %v253, 4
        %v576 = vsel %vm558, %v574, %v575
        %v577 = vrot.slane %v254, 4
        %v578 = vsel %vm558, %v575, %v577
        %v579 = vrot.slane %v255, 4
        %v580 = vrot.slane %v256, 4
        %v581 = vsel %vm558, %v579, %v580
        %v582 = vrot.slane %v257, 4
        %v583 = vsel %vm558, %v580, %v582
        %v584 = vrot.slane %v258, 4
        %v585 = vrot.slane %v259, 4
        %v586 = vsel %vm558, %v584, %v585
        %v587 = vrot.slane %v260, 4
        %v588 = vsel %vm558, %v585, %v587
        %v589 = vrot.slane %v261, 4
        %v590 = vrot.slane %v262, 4
        %v591 = vsel %vm558, %v589, %v590
        %v592 = vrot.slane %v263, 4
        %v593 = vsel %vm558, %v590, %v592
        %v594 = vrot.slane %v264, 4
        %v595 = vrot.slane %v265, 4
        %v596 = vsel %vm558, %v594, %v595
        %v597 = vrot.slane %v266, 4
        %v598 = vsel %vm558, %v595, %v597
        %vm599 = vcmask 261120
        %v600 = vsel %vm599, %v243, %v333
        %v601 = vsel %vm599, %v244, %v335
        %v602 = vsel %vm599, %v246, %v337
        %v603 = vsel %vm599, %v247, %v339
        %v604 = vsel %vm599, %v249, %v341
        %v605 = vsel %vm599, %v250, %v343
        %v606 = vsel %vm599, %v252, %v345
        %v607 = vsel %vm599, %v253, %v347
        %v608 = vsel %vm599, %v255, %v349
        %v609 = vsel %vm599, %v256, %v351
        %v610 = vsel %vm599, %v258, %v353
        %v611 = vsel %vm599, %v259, %v355
        %v612 = vsel %vm599, %v261, %v357
        %v613 = vsel %vm599, %v262, %v359
        %v614 = vsel %vm599, %v264, %v361
        %v615 = vsel %vm599, %v265, %v363
        %vm616 = vcmask 523264
        %v617 = vsel %vm616, %v600, %v422
        %v618 = vsel %vm616, %v601, %v424
        %v619 = vsel %vm616, %v602, %v426
        %v620 = vsel %vm616, %v603, %v428
        %v621 = vsel %vm616, %v604, %v430
        %v622 = vsel %vm616, %v605, %v432
        %v623 = vsel %vm616, %v606, %v434
        %v624 = vsel %vm616, %v607, %v436
        %v625 = vsel %vm616, %v608, %v438
        %v626 = vsel %vm616, %v609, %v440
        %v627 = vsel %vm616, %v610, %v442
        %v628 = vsel %vm616, %v611, %v444
        %v629 = vsel %vm616, %v612, %v446
        %v630 = vsel %vm616, %v613, %v448
        %v631 = vsel %vm616, %v614, %v450
        %v632 = vsel %vm616, %v615, %v452
        %vm633 = vcmask 785408
        %v634 = vsel %vm633, %v617, %v511
        %v635 = vsel %vm633, %v618, %v513
        %v636 = vsel %vm633, %v619, %v515
        %v637 = vsel %vm633, %v620, %v517
        %v638 = vsel %vm633, %v621, %v519
        %v639 = vsel %vm633, %v622, %v521
        %v640 = vsel %vm633, %v623, %v523
        %v641 = vsel %vm633, %v624, %v525
        %v642 = vsel %vm633, %v625, %v527
        %v643 = vsel %vm633, %v626, %v529
        %v644 = vsel %vm633, %v627, %v531
        %v645 = vsel %vm633, %v628, %v533
        %v646 = vsel %vm633, %v629, %v535
        %v647 = vsel %vm633, %v630, %v537
        %v648 = vsel %vm633, %v631, %v539
        %v649 = vsel %vm633, %v632, %v541
        %v650 = vld [vmem:[%s1] sm:$0xff]
        %v651 = vld [vmem:[%s1 + $0x8] sm:$0xff]
        %v652 = vld [vmem:[%s1 + $0x10] sm:$0xff]
        %v653 = vld [vmem:[%s1 + $0x18] sm:$0xff]
        %v654 = vld [vmem:[%s1 + $0x20] sm:$0xff]
        %v655 = vld [vmem:[%s1 + $0x28] sm:$0xff]
        %v656 = vld [vmem:[%s1 + $0x30] sm:$0xff]
        %v657 = vld [vmem:[%s1 + $0x38] sm:$0xff]
        %v658 = vld [vmem:[%s1 + $0x40] sm:$0xff]
        %v659 = vld [vmem:[%s1 + $0x48] sm:$0xff]
        %v660 = vld [vmem:[%s1 + $0x50] sm:$0xff]
        %v661 = vld [vmem:[%s1 + $0x58] sm:$0xff]
        %v662 = vld [vmem:[%s1 + $0x60] sm:$0xff]
        %v663 = vld [vmem:[%s1 + $0x68] sm:$0xff]
        %v664 = vld [vmem:[%s1 + $0x70] sm:$0xff]
        %v665 = vld [vmem:[%s1 + $0x78] sm:$0xff]
        %v666 = vld [vmem:[%s1 + $0x80] sm:$0xff]
        %v667 = vld [vmem:[%s1 + $0x88] sm:$0xff]
        %v668 = vld [vmem:[%s1 + $0x90] sm:$0xff]
        %v669 = vld [vmem:[%s1 + $0x98] sm:$0xff]
        %v670 = vld [vmem:[%s1 + $0xa0] sm:$0xff]
        %v671 = vld [vmem:[%s1 + $0xa8] sm:$0xff]
        %v672 = vld [vmem:[%s1 + $0xb0] sm:$0xff]
        %v673 = vld [vmem:[%s1 + $0xb8] sm:$0xff]
        %v674 = vld [vmem:[%s1 + $0xc0] sm:$0xff]
        %v675 = vld [vmem:[%s1 + $0xc8] sm:$0xff]
        %v676 = vld [vmem:[%s1 + $0xd0] sm:$0xff]
        %v677 = vld [vmem:[%s1 + $0xd8] sm:$0xff]
        %v678 = vld [vmem:[%s1 + $0xe0] sm:$0xff]
        %v679 = vld [vmem:[%s1 + $0xe8] sm:$0xff]
        %v680 = vld [vmem:[%s1 + $0xf0] sm:$0xff]
        %v681 = vld [vmem:[%s1 + $0xf8] sm:$0xff]
        %v682 = vld [vmem:[%s1 + $0x100] sm:$0xff]
        %v683 = vld [vmem:[%s1 + $0x108] sm:$0xff]
        %v684 = vld [vmem:[%s1 + $0x110] sm:$0xff]
        %v685 = vld [vmem:[%s1 + $0x118] sm:$0xff]
        %v686 = vld [vmem:[%s1 + $0x120] sm:$0xff]
        %v687 = vld [vmem:[%s1 + $0x128] sm:$0xff]
        %v688 = vld [vmem:[%s1 + $0x130] sm:$0xff]
        %v689 = vld [vmem:[%s1 + $0x138] sm:$0xff]
        %v690 = vld [vmem:[%s1 + $0x140] sm:$0xff]
        %v691 = vld [vmem:[%s1 + $0x148] sm:$0xff]
        %v692 = vld [vmem:[%s1 + $0x150] sm:$0xff]
        %v693 = vld [vmem:[%s1 + $0x158] sm:$0xff]
        %v694 = vld [vmem:[%s1 + $0x160] sm:$0xff]
        %v695 = vld [vmem:[%s1 + $0x168] sm:$0xff]
        %v696 = vld [vmem:[%s1 + $0x170] sm:$0xff]
        %v697 = vld [vmem:[%s1 + $0x178] sm:$0xff]
        %v698 = vld [vmem:[%s1 + $0x180] sm:$0xff]
        %v699 = vld [vmem:[%s1 + $0x188] sm:$0xff]
        %v700 = vld [vmem:[%s1 + $0x190] sm:$0xff]
        %v701 = vld [vmem:[%s1 + $0x198] sm:$0xff]
        %v702 = vld [vmem:[%s1 + $0x1a0] sm:$0xff]
        %v703 = vld [vmem:[%s1 + $0x1a8] sm:$0xff]
        %v704 = vld [vmem:[%s1 + $0x1b0] sm:$0xff]
        %v705 = vld [vmem:[%s1 + $0x1b8] sm:$0xff]
        %v706 = vld [vmem:[%s1 + $0x1c0] sm:$0xff]
        %v707 = vld [vmem:[%s1 + $0x1c8] sm:$0xff]
        %v708 = vld [vmem:[%s1 + $0x1d0] sm:$0xff]
        %v709 = vld [vmem:[%s1 + $0x1d8] sm:$0xff]
        %v710 = vld [vmem:[%s2] sm:$0x7]
        %v712 = vlaneseq
        %v713 = vshrl.u32 %v712, 7
        %v714 = vsub.s32 0, %v713
        %v715 = vrot.slane %v710, %v714
        %v716 = vlaneseq
        %v717 = vshrl.u32 %v716, 7
        %v718 = vsub.s32 1, %v717
        %v719 = vrot.slane %v710, %v718
        %v720 = vlaneseq
        %v721 = vshrl.u32 %v720, 7
        %v722 = vsub.s32 2, %v721
        %v723 = vrot.slane %v710, %v722
        %v727 = vsel %vm599, %v561, 0
        %v729 = vsel %vm599, %v563, 0
        %v731 = vsel %vm599, %v566, 0
        %v733 = vsel %vm599, %v568, 0
        %v735 = vsel %vm599, %v571, 0
        %v737 = vsel %vm599, %v573, 0
        %v739 = vsel %vm599, %v576, 0
        %v741 = vsel %vm599, %v578, 0
        %v743 = vsel %vm599, %v581, 0
        %v745 = vsel %vm599, %v583, 0
        %v747 = vsel %vm599, %v586, 0
        %v749 = vsel %vm599, %v588, 0
        %v751 = vsel %vm599, %v591, 0
        %v753 = vsel %vm599, %v593, 0
        %v755 = vsel %vm599, %v596, 0
        %v757 = vsel %vm599, %v598, 0
        %759 = vmatprep.subr.mxu0 %v651
        %760 = vmatpush1.msra.mxu0 %v650
        %761 = vmatprep.subr.mxu0 %v654
        %762 = vmatpush1.msra.mxu0 %v653
        %763 = vmatprep.subr.mxu0 %v657
        %764 = vmatpush1.msra.mxu0 %v656
        %765 = vmatprep.subr.mxu0 %v660
        %766 = vmatpush1.msra.mxu0 %v659
        %767 = vmatprep.subr.mxu0 %v663
        %768 = vmatpush1.msra.mxu0 %v662
        %769 = vmatprep.subr.mxu0 %v666
        %770 = vmatpush1.msra.mxu0 %v665
        %771 = vmatprep.subr.mxu0 %v669
        %772 = vmatpush1.msra.mxu0 %v668
        %773 = vmatprep.subr.mxu0 %v672
        %774 = vmatpush1.msra.mxu0 %v671
        %775 = vmatprep.subr.mxu0 %v675
        %776 = vmatpush1.msra.mxu0 %v674
        %777 = vmatprep.subr.mxu0 %v678
        %778 = vmatpush1.msra.mxu0 %v677
        %779 = vmatprep.subr.mxu0 %v681
        %780 = vmatpush1.msra.mxu0 %v680
        %781 = vmatprep.subr.mxu0 %v684
        %782 = vmatpush1.msra.mxu0 %v683
        %783 = vmatprep.subr.mxu0 %v687
        %784 = vmatpush1.msra.mxu0 %v686
        %785 = vmatprep.subr.mxu0 %v690
        %786 = vmatpush1.msra.mxu0 %v689
        %787 = vmatprep.subr.mxu0 %v693
        %788 = vmatpush1.msra.mxu0 %v692
        %789 = vmatprep.subr.mxu0 %v696
        %790 = vmatpush1.msra.mxu0 %v695
        %791 = vmatprep.subr.mxu0 %v699
        %792 = vmatpush1.msra.mxu0 %v698
        %793 = vmatprep.subr.mxu0 %v702
        %794 = vmatpush1.msra.mxu0 %v701
        %795 = vmatprep.subr.mxu0 %v705
        %796 = vmatpush1.msra.mxu0 %v704
        %797 = vmatprep.subr.mxu0 %v708
        %798 = vmatpush1.msra.mxu0 %v707
        %799 = vmatprep.subr.mxu0 0.0
        %800 = vmatpush1.msra.mxu0 0.0
        %801 = vmatprep.subr.mxu0 0.0
        %802 = vmatpush1.msra.mxu0 0.0
        %803 = vmatprep.subr.mxu0 0.0
        %804 = vmatpush1.msra.mxu0 0.0
        %805 = vmatprep.subr.mxu0 0.0
        %806 = vmatpush1.msra.mxu0 0.0
        %807 = vmatprep.subr.mxu0 0.0
        %808 = vmatpush1.msra.mxu0 0.0
        %809 = vmatprep.subr.mxu0 0.0
        %810 = vmatpush1.msra.mxu0 0.0
        %811 = vmatprep.subr.mxu0 0.0
        %812 = vmatpush1.msra.mxu0 0.0
        %813 = vmatprep.subr.mxu0 0.0
        %814 = vmatpush1.msra.mxu0 0.0
        %815 = vmatprep.subr.mxu0 0.0
        %816 = vmatpush1.msra.mxu0 0.0
        %817 = vmatprep.subr.mxu0 0.0
        %818 = vmatpush1.msra.mxu0 0.0
        %819 = vmatprep.subr.mxu0 0.0
        %820 = vmatpush1.msra.mxu0 0.0
        %821 = vmatprep.subr.mxu0 0.0
        %822 = vmatpush1.msra.mxu0 0.0
        %823 = vmatprep.mubr.f32.mxu0 %v727
        %824 = vmatmul.mubr.f32.gmra.mrb[0].mxu0 %v634
        %v825 = vpop.f32.mrb[0].mxu0
        %v826 = vadd.f32 %v715, %v825
        %v827 = vpop.f32.mrb[0].mxu0
        %v828 = vadd.f32 %v719, %v827
        %829 = vmatprep.mubr.f32.mxu0 %v729
        %830 = vmatmul.mubr.f32.gmra.mrb[0].mxu0 %v635
        %v831 = vpop.f32.mrb[0].mxu0
        %v832 = vadd.f32 %v715, %v831
        %v833 = vpop.f32.mrb[0].mxu0
        %v834 = vadd.f32 %v719, %v833
        %835 = vmatprep.mubr.f32.mxu0 %v731
        %836 = vmatmul.mubr.f32.gmra.mrb[0].mxu0 %v636
        %v837 = vpop.f32.mrb[0].mxu0
        %v838 = vadd.f32 %v715, %v837
        %v839 = vpop.f32.mrb[0].mxu0
        %v840 = vadd.f32 %v719, %v839
        %841 = vmatprep.mubr.f32.mxu0 %v733
        %842 = vmatmul.mubr.f32.gmra.mrb[0].mxu0 %v637
        %v843 = vpop.f32.mrb[0].mxu0
        %v844 = vadd.f32 %v715, %v843
        %v845 = vpop.f32.mrb[0].mxu0
        %v846 = vadd.f32 %v719, %v845
        %847 = vmatprep.mubr.f32.mxu0 %v735
        %848 = vmatmul.mubr.f32.gmra.mrb[0].mxu0 %v638
        %v849 = vpop.f32.mrb[0].mxu0
        %v850 = vadd.f32 %v715, %v849
        %v851 = vpop.f32.mrb[0].mxu0
        %v852 = vadd.f32 %v719, %v851
        %853 = vmatprep.mubr.f32.mxu0 %v737
        %854 = vmatmul.mubr.f32.gmra.mrb[0].mxu0 %v639
        %v855 = vpop.f32.mrb[0].mxu0
        %v856 = vadd.f32 %v715, %v855
        %v857 = vpop.f32.mrb[0].mxu0
        %v858 = vadd.f32 %v719, %v857
        %859 = vmatprep.mubr.f32.mxu0 %v739
        %860 = vmatmul.mubr.f32.gmra.mrb[0].mxu0 %v640
        %v861 = vpop.f32.mrb[0].mxu0
        %v862 = vadd.f32 %v715, %v861
        %v863 = vpop.f32.mrb[0].mxu0
        %v864 = vadd.f32 %v719, %v863
        %865 = vmatprep.mubr.f32.mxu0 %v741
        %866 = vmatmul.mubr.f32.gmra.mrb[0].mxu0 %v641
        %v867 = vpop.f32.mrb[0].mxu0
        %v868 = vadd.f32 %v715, %v867
        %v869 = vpop.f32.mrb[0].mxu0
        %v870 = vadd.f32 %v719, %v869
        %871 = vmatprep.mubr.f32.mxu0 %v743
        %872 = vmatmul.mubr.f32.gmra.mrb[0].mxu0 %v642
        %v873 = vpop.f32.mrb[0].mxu0
        %v874 = vadd.f32 %v715, %v873
        %v875 = vpop.f32.mrb[0].mxu0
        %v876 = vadd.f32 %v719, %v875
        %877 = vmatprep.mubr.f32.mxu0 %v745
        %878 = vmatmul.mubr.f32.gmra.mrb[0].mxu0 %v643
        %v879 = vpop.f32.mrb[0].mxu0
        %v880 = vadd.f32 %v715, %v879
        %v881 = vpop.f32.mrb[0].mxu0
        %v882 = vadd.f32 %v719, %v881
        %883 = vmatprep.mubr.f32.mxu0 %v747
        %884 = vmatmul.mubr.f32.gmra.mrb[0].mxu0 %v644
        %v885 = vpop.f32.mrb[0].mxu0
        %v886 = vadd.f32 %v715, %v885
        %v887 = vpop.f32.mrb[0].mxu0
        %v888 = vadd.f32 %v719, %v887
        %889 = vmatprep.mubr.f32.mxu0 %v749
        %890 = vmatmul.mubr.f32.gmra.mrb[0].mxu0 %v645
        %v891 = vpop.f32.mrb[0].mxu0
        %v892 = vadd.f32 %v715, %v891
        %v893 = vpop.f32.mrb[0].mxu0
        %v894 = vadd.f32 %v719, %v893
        %895 = vmatprep.mubr.f32.mxu0 %v751
        %896 = vmatmul.mubr.f32.gmra.mrb[0].mxu0 %v646
        %v897 = vpop.f32.mrb[0].mxu0
        %v898 = vadd.f32 %v715, %v897
        %v899 = vpop.f32.mrb[0].mxu0
        %v900 = vadd.f32 %v719, %v899
        %901 = vmatprep.mubr.f32.mxu0 %v753
        %902 = vmatmul.mubr.f32.gmra.mrb[0].mxu0 %v647
        %v903 = vpop.f32.mrb[0].mxu0
        %v904 = vadd.f32 %v715, %v903
        %v905 = vpop.f32.mrb[0].mxu0
        %v906 = vadd.f32 %v719, %v905
        %907 = vmatprep.mubr.f32.mxu0 %v755
        %908 = vmatmul.mubr.f32.gmra.mrb[0].mxu0 %v648
        %v909 = vpop.f32.mrb[0].mxu0
        %v910 = vadd.f32 %v715, %v909
        %v911 = vpop.f32.mrb[0].mxu0
        %v912 = vadd.f32 %v719, %v911
        %913 = vmatprep.mubr.f32.mxu0 %v757
        %914 = vmatmul.mubr.f32.gmra.mrb[0].mxu0 %v649
        %v915 = vpop.f32.mrb[0].mxu0
        %v916 = vadd.f32 %v715, %v915
        %v917 = vpop.f32.mrb[0].mxu0
        %v918 = vadd.f32 %v719, %v917
        %919 = vdwg.mxu0
        %920 = vmatprep.subr.mxu0 0.0
        %921 = vmatpush1.msra.mxu0 %v652
        %922 = vmatprep.subr.mxu0 0.0
        %923 = vmatpush1.msra.mxu0 %v655
        %924 = vmatprep.subr.mxu0 0.0
        %925 = vmatpush1.msra.mxu0 %v658
        %926 = vmatprep.subr.mxu0 0.0
        %927 = vmatpush1.msra.mxu0 %v661
        %928 = vmatprep.subr.mxu0 0.0
        %929 = vmatpush1.msra.mxu0 %v664
        %930 = vmatprep.subr.mxu0 0.0
        %931 = vmatpush1.msra.mxu0 %v667
        %932 = vmatprep.subr.mxu0 0.0
        %933 = vmatpush1.msra.mxu0 %v670
        %934 = vmatprep.subr.mxu0 0.0
        %935 = vmatpush1.msra.mxu0 %v673
        %936 = vmatprep.subr.mxu0 0.0
        %937 = vmatpush1.msra.mxu0 %v676
        %938 = vmatprep.subr.mxu0 0.0
        %939 = vmatpush1.msra.mxu0 %v679
        %940 = vmatprep.subr.mxu0 0.0
        %941 = vmatpush1.msra.mxu0 %v682
        %942 = vmatprep.subr.mxu0 0.0
        %943 = vmatpush1.msra.mxu0 %v685
        %944 = vmatprep.subr.mxu0 0.0
        %945 = vmatpush1.msra.mxu0 %v688
        %946 = vmatprep.subr.mxu0 0.0
        %947 = vmatpush1.msra.mxu0 %v691
        %948 = vmatprep.subr.mxu0 0.0
        %949 = vmatpush1.msra.mxu0 %v694
        %950 = vmatprep.subr.mxu0 0.0
        %951 = vmatpush1.msra.mxu0 %v697
        %952 = vmatprep.subr.mxu0 0.0
        %953 = vmatpush1.msra.mxu0 %v700
        %954 = vmatprep.subr.mxu0 0.0
        %955 = vmatpush1.msra.mxu0 %v703
        %956 = vmatprep.subr.mxu0 0.0
        %957 = vmatpush1.msra.mxu0 %v706
        %958 = vmatprep.subr.mxu0 0.0
        %959 = vmatpush1.msra.mxu0 %v709
        %960 = vmatprep.subr.mxu0 0.0
        %961 = vmatpush1.msra.mxu0 0.0
        %962 = vmatprep.subr.mxu0 0.0
        %963 = vmatpush1.msra.mxu0 0.0
        %964 = vmatprep.subr.mxu0 0.0
        %965 = vmatpush1.msra.mxu0 0.0
        %966 = vmatprep.subr.mxu0 0.0
        %967 = vmatpush1.msra.mxu0 0.0
        %968 = vmatprep.subr.mxu0 0.0
        %969 = vmatpush1.msra.mxu0 0.0
        %970 = vmatprep.subr.mxu0 0.0
        %971 = vmatpush1.msra.mxu0 0.0
        %972 = vmatprep.subr.mxu0 0.0
        %973 = vmatpush1.msra.mxu0 0.0
        %974 = vmatprep.subr.mxu0 0.0
        %975 = vmatpush1.msra.mxu0 0.0
        %976 = vmatprep.subr.mxu0 0.0
        %977 = vmatpush1.msra.mxu0 0.0
        %978 = vmatprep.subr.mxu0 0.0
        %979 = vmatpush1.msra.mxu0 0.0
        %980 = vmatprep.subr.mxu0 0.0
        %981 = vmatpush1.msra.mxu0 0.0
        %982 = vmatprep.subr.mxu0 0.0
        %983 = vmatpush1.msra.mxu0 0.0
        %984 = vmatprep.mubr.f32.mxu0 %v727
        %985 = vmatmul.mubr.f32.gmra.mrb[0].mxu0 %v634
        %v986 = vpop.f32.mrb[0].mxu0
        %v987 = vadd.f32 %v723, %v986
        %v988 = vpop.f32.mrb[0].mxu0
        %989 = vmatprep.mubr.f32.mxu0 %v729
        %990 = vmatmul.mubr.f32.gmra.mrb[0].mxu0 %v635
        %v991 = vpop.f32.mrb[0].mxu0
        %v992 = vadd.f32 %v723, %v991
        %v993 = vpop.f32.mrb[0].mxu0
        %994 = vmatprep.mubr.f32.mxu0 %v731
        %995 = vmatmul.mubr.f32.gmra.mrb[0].mxu0 %v636
        %v996 = vpop.f32.mrb[0].mxu0
        %v997 = vadd.f32 %v723, %v996
        %v998 = vpop.f32.mrb[0].mxu0
        %999 = vmatprep.mubr.f32.mxu0 %v733
        %1000 = vmatmul.mubr.f32.gmra.mrb[0].mxu0 %v637
        %v1001 = vpop.f32.mrb[0].mxu0
        %v1002 = vadd.f32 %v723, %v1001
        %v1003 = vpop.f32.mrb[0].mxu0
        %1004 = vmatprep.mubr.f32.mxu0 %v735
        %1005 = vmatmul.mubr.f32.gmra.mrb[0].mxu0 %v638
        %v1006 = vpop.f32.mrb[0].mxu0
        %v1007 = vadd.f32 %v723, %v1006
        %v1008 = vpop.f32.mrb[0].mxu0
        %1009 = vmatprep.mubr.f32.mxu0 %v737
        %1010 = vmatmul.mubr.f32.gmra.mrb[0].mxu0 %v639
        %v1011 = vpop.f32.mrb[0].mxu0
        %v1012 = vadd.f32 %v723, %v1011
        %v1013 = vpop.f32.mrb[0].mxu0
        %1014 = vmatprep.mubr.f32.mxu0 %v739
        %1015 = vmatmul.mubr.f32.gmra.mrb[0].mxu0 %v640
        %v1016 = vpop.f32.mrb[0].mxu0
        %v1017 = vadd.f32 %v723, %v1016
        %v1018 = vpop.f32.mrb[0].mxu0
        %1019 = vmatprep.mubr.f32.mxu0 %v741
        %1020 = vmatmul.mubr.f32.gmra.mrb[0].mxu0 %v641
        %v1021 = vpop.f32.mrb[0].mxu0
        %v1022 = vadd.f32 %v723, %v1021
        %v1023 = vpop.f32.mrb[0].mxu0
        %1024 = vmatprep.mubr.f32.mxu0 %v743
        %1025 = vmatmul.mubr.f32.gmra.mrb[0].mxu0 %v642
        %v1026 = vpop.f32.mrb[0].mxu0
        %v1027 = vadd.f32 %v723, %v1026
        %v1028 = vpop.f32.mrb[0].mxu0
        %1029 = vmatprep.mubr.f32.mxu0 %v745
        %1030 = vmatmul.mubr.f32.gmra.mrb[0].mxu0 %v643
        %v1031 = vpop.f32.mrb[0].mxu0
        %v1032 = vadd.f32 %v723, %v1031
        %v1033 = vpop.f32.mrb[0].mxu0
        %1034 = vmatprep.mubr.f32.mxu0 %v747
        %1035 = vmatmul.mubr.f32.gmra.mrb[0].mxu0 %v644
        %v1036 = vpop.f32.mrb[0].mxu0
        %v1037 = vadd.f32 %v723, %v1036
        %v1038 = vpop.f32.mrb[0].mxu0
        %1039 = vmatprep.mubr.f32.mxu0 %v749
        %1040 = vmatmul.mubr.f32.gmra.mrb[0].mxu0 %v645
        %v1041 = vpop.f32.mrb[0].mxu0
        %v1042 = vadd.f32 %v723, %v1041
        %v1043 = vpop.f32.mrb[0].mxu0
        %1044 = vmatprep.mubr.f32.mxu0 %v751
        %1045 = vmatmul.mubr.f32.gmra.mrb[0].mxu0 %v646
        %v1046 = vpop.f32.mrb[0].mxu0
        %v1047 = vadd.f32 %v723, %v1046
        %v1048 = vpop.f32.mrb[0].mxu0
        %1049 = vmatprep.mubr.f32.mxu0 %v753
        %1050 = vmatmul.mubr.f32.gmra.mrb[0].mxu0 %v647
        %v1051 = vpop.f32.mrb[0].mxu0
        %v1052 = vadd.f32 %v723, %v1051
        %v1053 = vpop.f32.mrb[0].mxu0
        %1054 = vmatprep.mubr.f32.mxu0 %v755
        %1055 = vmatmul.mubr.f32.gmra.mrb[0].mxu0 %v648
        %v1056 = vpop.f32.mrb[0].mxu0
        %v1057 = vadd.f32 %v723, %v1056
        %v1058 = vpop.f32.mrb[0].mxu0
        %1059 = vmatprep.mubr.f32.mxu0 %v757
        %1060 = vmatmul.mubr.f32.gmra.mrb[0].mxu0 %v649
        %v1061 = vpop.f32.mrb[0].mxu0
        %v1062 = vadd.f32 %v723, %v1061
        %v1063 = vpop.f32.mrb[0].mxu0
        %1064 = vdwg.mxu0
        %v1065 = vmax.f32 %v826, 0.0
        %v1066 = vmax.f32 %v828, 0.0
        %v1067 = vmax.f32 %v987, 0.0
        %v1068 = vmax.f32 %v832, 0.0
        %v1069 = vmax.f32 %v834, 0.0
        %v1070 = vmax.f32 %v992, 0.0
        %v1071 = vmax.f32 %v838, 0.0
        %v1072 = vmax.f32 %v840, 0.0
        %v1073 = vmax.f32 %v997, 0.0
        %v1074 = vmax.f32 %v844, 0.0
        %v1075 = vmax.f32 %v846, 0.0
        %v1076 = vmax.f32 %v1002, 0.0
        %v1077 = vmax.f32 %v850, 0.0
        %v1078 = vmax.f32 %v852, 0.0
        %v1079 = vmax.f32 %v1007, 0.0
        %v1080 = vmax.f32 %v856, 0.0
        %v1081 = vmax.f32 %v858, 0.0
        %v1082 = vmax.f32 %v1012, 0.0
        %v1083 = vmax.f32 %v862, 0.0
        %v1084 = vmax.f32 %v864, 0.0
        %v1085 = vmax.f32 %v1017, 0.0
        %v1086 = vmax.f32 %v868, 0.0
        %v1087 = vmax.f32 %v870, 0.0
        %v1088 = vmax.f32 %v1022, 0.0
        %v1089 = vmax.f32 %v874, 0.0
        %v1090 = vmax.f32 %v876, 0.0
        %v1091 = vmax.f32 %v1027, 0.0
        %v1092 = vmax.f32 %v880, 0.0
        %v1093 = vmax.f32 %v882, 0.0
        %v1094 = vmax.f32 %v1032, 0.0
        %v1095 = vmax.f32 %v886, 0.0
        %v1096 = vmax.f32 %v888, 0.0
        %v1097 = vmax.f32 %v1037, 0.0
        %v1098 = vmax.f32 %v892, 0.0
        %v1099 = vmax.f32 %v894, 0.0
        %v1100 = vmax.f32 %v1042, 0.0
        %v1101 = vmax.f32 %v898, 0.0
        %v1102 = vmax.f32 %v900, 0.0
        %v1103 = vmax.f32 %v1047, 0.0
        %v1104 = vmax.f32 %v904, 0.0
        %v1105 = vmax.f32 %v906, 0.0
        %v1106 = vmax.f32 %v1052, 0.0
        %v1107 = vmax.f32 %v910, 0.0
        %v1108 = vmax.f32 %v912, 0.0
        %v1109 = vmax.f32 %v1057, 0.0
        %v1110 = vmax.f32 %v916, 0.0
        %v1111 = vmax.f32 %v918, 0.0
        %v1112 = vmax.f32 %v1062, 0.0
        %v1113 = vlaneseq
        %v1114 = vshrl.u32 %v1113, 7
        %v1115 = vadd.s32 %v1114, 8
        %v1116 = vlaneseq
        %v1117 = vand.u32 %v1116, 127
        %v1118 = vadd.s32 %v1117, 128
        %v1119 = vadd.s32 %v1117, 256
        %vm1120 = vcmp.ge.s32.totalorder %v1117, 0
        %vm1121 = vcmp.ge.s32.totalorder %v1118, 0
        %vm1122 = vcmp.ge.s32.totalorder %v1119, 0
        %vm1123 = vcmp.lt.s32.totalorder %v1117, 128
        %vm1124 = vcmp.lt.s32.totalorder %v1118, 128
        %vm1125 = vcmp.lt.s32.totalorder %v1119, 128
        %vm1126 = vmand %vm1120, %vm1123
        %vm1127 = vmand %vm1121, %vm1124
        %vm1128 = vmand %vm1122, %vm1125
        %v1129 = vsel %vm1126, 14, 0
        %v1130 = vsel %vm1127, 14, 0
        %v1131 = vsel %vm1128, 14, 0
        %vm1132 = vcmp.ge.s32.totalorder %v1117, 128
        %vm1133 = vcmp.ge.s32.totalorder %v1118, 128
        %vm1134 = vcmp.ge.s32.totalorder %v1119, 128
        %vm1135 = vcmp.lt.s32.totalorder %v1117, 256
        %vm1136 = vcmp.lt.s32.totalorder %v1118, 256
        %vm1137 = vcmp.lt.s32.totalorder %v1119, 256
        %vm1138 = vmand %vm1132, %vm1135
        %vm1139 = vmand %vm1133, %vm1136
        %vm1140 = vmand %vm1134, %vm1137
        %v1141 = vsel %vm1138, 13, %v1129
        %v1142 = vsel %vm1139, 13, %v1130
        %v1143 = vsel %vm1140, 13, %v1131
        %vm1144 = vcmp.ge.s32.totalorder %v1117, 256
        %vm1145 = vcmp.ge.s32.totalorder %v1118, 256
        %vm1146 = vcmp.ge.s32.totalorder %v1119, 256
        %vm1147 = vcmp.lt.s32.totalorder %v1117, 384
        %vm1148 = vcmp.lt.s32.totalorder %v1118, 384
        %vm1149 = vcmp.lt.s32.totalorder %v1119, 384
        %vm1150 = vmand %vm1144, %vm1147
        %vm1151 = vmand %vm1145, %vm1148
        %vm1152 = vmand %vm1146, %vm1149
        %v1153 = vsel %vm1150, 12, %v1141
        %v1154 = vsel %vm1151, 12, %v1142
        %v1155 = vsel %vm1152, 12, %v1143
        %vm1156 = vcmp.lt.s32.totalorder %v1114, %v1153
        %vm1157 = vcmp.lt.s32.totalorder %v1114, %v1154
        %vm1158 = vcmp.lt.s32.totalorder %v1114, %v1155
        %vm1159 = vcmp.lt.s32.totalorder %v1115, %v1153
        %vm1160 = vcmp.lt.s32.totalorder %v1115, %v1154
        %vm1161 = vcmp.lt.s32.totalorder %v1115, %v1155
        %v1162 = vsel %vm1156, 1, 0
        %v1163 = vsel %vm1157, 1, 0
        %v1164 = vsel %vm1158, 1, 0
        %v1165 = vsel %vm1159, 1, 0
        %v1166 = vsel %vm1160, 1, 0
        %v1167 = vsel %vm1161, 1, 0
        %v1168 = vcvt.s32.f32 %v1162
        %v1169 = vcvt.s32.f32 %v1163
        %v1170 = vcvt.s32.f32 %v1164
        %v1171 = vcvt.s32.f32 %v1165
        %v1172 = vcvt.s32.f32 %v1166
        %v1173 = vcvt.s32.f32 %v1167
        %v1174 = vmul.f32 %v1065, %v1168
        %v1175 = vmul.f32 %v1066, %v1169
        %v1176 = vmul.f32 %v1067, %v1170
        %v1177 = vmul.f32 %v1068, %v1171
        %v1178 = vmul.f32 %v1069, %v1172
        %v1179 = vmul.f32 %v1070, %v1173
        %v1180 = vmul.f32 %v1071, %v1168
        %v1181 = vmul.f32 %v1072, %v1169
        %v1182 = vmul.f32 %v1073, %v1170
        %v1183 = vmul.f32 %v1074, %v1171
        %v1184 = vmul.f32 %v1075, %v1172
        %v1185 = vmul.f32 %v1076, %v1173
        %v1186 = vmul.f32 %v1077, %v1168
        %v1187 = vmul.f32 %v1078, %v1169
        %v1188 = vmul.f32 %v1079, %v1170
        %v1189 = vmul.f32 %v1080, %v1171
        %v1190 = vmul.f32 %v1081, %v1172
        %v1191 = vmul.f32 %v1082, %v1173
        %v1192 = vmul.f32 %v1083, %v1168
        %v1193 = vmul.f32 %v1084, %v1169
        %v1194 = vmul.f32 %v1085, %v1170
        %v1195 = vmul.f32 %v1086, %v1171
        %v1196 = vmul.f32 %v1087, %v1172
        %v1197 = vmul.f32 %v1088, %v1173
        %v1198 = vmul.f32 %v1089, %v1168
        %v1199 = vmul.f32 %v1090, %v1169
        %v1200 = vmul.f32 %v1091, %v1170
        %v1201 = vmul.f32 %v1092, %v1171
        %v1202 = vmul.f32 %v1093, %v1172
        %v1203 = vmul.f32 %v1094, %v1173
        %v1204 = vmul.f32 %v1095, %v1168
        %v1205 = vmul.f32 %v1096, %v1169
        %v1206 = vmul.f32 %v1097, %v1170
        %v1207 = vmul.f32 %v1098, %v1171
        %v1208 = vmul.f32 %v1099, %v1172
        %v1209 = vmul.f32 %v1100, %v1173
        %v1210 = vmul.f32 %v1101, %v1168
        %v1211 = vmul.f32 %v1102, %v1169
        %v1212 = vmul.f32 %v1103, %v1170
        %v1213 = vmul.f32 %v1104, %v1171
        %v1214 = vmul.f32 %v1105, %v1172
        %v1215 = vmul.f32 %v1106, %v1173
        %v1216 = vmul.f32 %v1107, %v1168
        %v1217 = vmul.f32 %v1108, %v1169
        %v1218 = vmul.f32 %v1109, %v1170
        %v1219 = vmul.f32 %v1110, %v1171
        %v1220 = vmul.f32 %v1111, %v1172
        %v1221 = vmul.f32 %v1112, %v1173
        %v1222 = vmax.f32 %v1174, %v1177
        %v1223 = vrot.slane %v1222, 4
        %v1224 = vmax.f32 %v1222, %v1223
        %v1225 = vrot.slane %v1224, 2
        %v1226 = vmax.f32 %v1224, %v1225
        %v1227 = vrot.slane %v1226, 1
        %v1228 = vmax.f32 %v1226, %v1227
        %v1229 = vmax.f32 %v1175, %v1178
        %v1230 = vrot.slane %v1229, 4
        %v1231 = vmax.f32 %v1229, %v1230
        %v1232 = vrot.slane %v1231, 2
        %v1233 = vmax.f32 %v1231, %v1232
        %v1234 = vrot.slane %v1233, 1
        %v1235 = vmax.f32 %v1233, %v1234
        %v1236 = vmax.f32 %v1176, %v1179
        %v1237 = vrot.slane %v1236, 4
        %v1238 = vmax.f32 %v1236, %v1237
        %v1239 = vrot.slane %v1238, 2
        %v1240 = vmax.f32 %v1238, %v1239
        %v1241 = vrot.slane %v1240, 1
        %v1242 = vmax.f32 %v1240, %v1241
        %v1243 = vmax.f32 %v1180, %v1183
        %v1244 = vrot.slane %v1243, 4
        %v1245 = vmax.f32 %v1243, %v1244
        %v1246 = vrot.slane %v1245, 2
        %v1247 = vmax.f32 %v1245, %v1246
        %v1248 = vrot.slane %v1247, 1
        %v1249 = vmax.f32 %v1247, %v1248
        %v1250 = vmax.f32 %v1181, %v1184
        %v1251 = vrot.slane %v1250, 4
        %v1252 = vmax.f32 %v1250, %v1251
        %v1253 = vrot.slane %v1252, 2
        %v1254 = vmax.f32 %v1252, %v1253
        %v1255 = vrot.slane %v1254, 1
        %v1256 = vmax.f32 %v1254, %v1255
        %v1257 = vmax.f32 %v1182, %v1185
        %v1258 = vrot.slane %v1257, 4
        %v1259 = vmax.f32 %v1257, %v1258
        %v1260 = vrot.slane %v1259, 2
        %v1261 = vmax.f32 %v1259, %v1260
        %v1262 = vrot.slane %v1261, 1
        %v1263 = vmax.f32 %v1261, %v1262
        %v1264 = vmax.f32 %v1186, %v1189
        %v1265 = vrot.slane %v1264, 4
        %v1266 = vmax.f32 %v1264, %v1265
        %v1267 = vrot.slane %v1266, 2
        %v1268 = vmax.f32 %v1266, %v1267
        %v1269 = vrot.slane %v1268, 1
        %v1270 = vmax.f32 %v1268, %v1269
        %v1271 = vmax.f32 %v1187, %v1190
        %v1272 = vrot.slane %v1271, 4
        %v1273 = vmax.f32 %v1271, %v1272
        %v1274 = vrot.slane %v1273, 2
        %v1275 = vmax.f32 %v1273, %v1274
        %v1276 = vrot.slane %v1275, 1
        %v1277 = vmax.f32 %v1275, %v1276
        %v1278 = vmax.f32 %v1188, %v1191
        %v1279 = vrot.slane %v1278, 4
        %v1280 = vmax.f32 %v1278, %v1279
        %v1281 = vrot.slane %v1280, 2
        %v1282 = vmax.f32 %v1280, %v1281
        %v1283 = vrot.slane %v1282, 1
        %v1284 = vmax.f32 %v1282, %v1283
        %v1285 = vmax.f32 %v1192, %v1195
        %v1286 = vrot.slane %v1285, 4
        %v1287 = vmax.f32 %v1285, %v1286
        %v1288 = vrot.slane %v1287, 2
        %v1289 = vmax.f32 %v1287, %v1288
        %v1290 = vrot.slane %v1289, 1
        %v1291 = vmax.f32 %v1289, %v1290
        %v1292 = vmax.f32 %v1193, %v1196
        %v1293 = vrot.slane %v1292, 4
        %v1294 = vmax.f32 %v1292, %v1293
        %v1295 = vrot.slane %v1294, 2
        %v1296 = vmax.f32 %v1294, %v1295
        %v1297 = vrot.slane %v1296, 1
        %v1298 = vmax.f32 %v1296, %v1297
        %v1299 = vmax.f32 %v1194, %v1197
        %v1300 = vrot.slane %v1299, 4
        %v1301 = vmax.f32 %v1299, %v1300
        %v1302 = vrot.slane %v1301, 2
        %v1303 = vmax.f32 %v1301, %v1302
        %v1304 = vrot.slane %v1303, 1
        %v1305 = vmax.f32 %v1303, %v1304
        %v1306 = vmax.f32 %v1198, %v1201
        %v1307 = vrot.slane %v1306, 4
        %v1308 = vmax.f32 %v1306, %v1307
        %v1309 = vrot.slane %v1308, 2
        %v1310 = vmax.f32 %v1308, %v1309
        %v1311 = vrot.slane %v1310, 1
        %v1312 = vmax.f32 %v1310, %v1311
        %v1313 = vmax.f32 %v1199, %v1202
        %v1314 = vrot.slane %v1313, 4
        %v1315 = vmax.f32 %v1313, %v1314
        %v1316 = vrot.slane %v1315, 2
        %v1317 = vmax.f32 %v1315, %v1316
        %v1318 = vrot.slane %v1317, 1
        %v1319 = vmax.f32 %v1317, %v1318
        %v1320 = vmax.f32 %v1200, %v1203
        %v1321 = vrot.slane %v1320, 4
        %v1322 = vmax.f32 %v1320, %v1321
        %v1323 = vrot.slane %v1322, 2
        %v1324 = vmax.f32 %v1322, %v1323
        %v1325 = vrot.slane %v1324, 1
        %v1326 = vmax.f32 %v1324, %v1325
        %v1327 = vmax.f32 %v1204, %v1207
        %v1328 = vrot.slane %v1327, 4
        %v1329 = vmax.f32 %v1327, %v1328
        %v1330 = vrot.slane %v1329, 2
        %v1331 = vmax.f32 %v1329, %v1330
        %v1332 = vrot.slane %v1331, 1
        %v1333 = vmax.f32 %v1331, %v1332
        %v1334 = vmax.f32 %v1205, %v1208
        %v1335 = vrot.slane %v1334, 4
        %v1336 = vmax.f32 %v1334, %v1335
        %v1337 = vrot.slane %v1336, 2
        %v1338 = vmax.f32 %v1336, %v1337
        %v1339 = vrot.slane %v1338, 1
        %v1340 = vmax.f32 %v1338, %v1339
        %v1341 = vmax.f32 %v1206, %v1209
        %v1342 = vrot.slane %v1341, 4
        %v1343 = vmax.f32 %v1341, %v1342
        %v1344 = vrot.slane %v1343, 2
        %v1345 = vmax.f32 %v1343, %v1344
        %v1346 = vrot.slane %v1345, 1
        %v1347 = vmax.f32 %v1345, %v1346
        %v1348 = vmax.f32 %v1210, %v1213
        %v1349 = vrot.slane %v1348, 4
        %v1350 = vmax.f32 %v1348, %v1349
        %v1351 = vrot.slane %v1350, 2
        %v1352 = vmax.f32 %v1350, %v1351
        %v1353 = vrot.slane %v1352, 1
        %v1354 = vmax.f32 %v1352, %v1353
        %v1355 = vmax.f32 %v1211, %v1214
        %v1356 = vrot.slane %v1355, 4
        %v1357 = vmax.f32 %v1355, %v1356
        %v1358 = vrot.slane %v1357, 2
        %v1359 = vmax.f32 %v1357, %v1358
        %v1360 = vrot.slane %v1359, 1
        %v1361 = vmax.f32 %v1359, %v1360
        %v1362 = vmax.f32 %v1212, %v1215
        %v1363 = vrot.slane %v1362, 4
        %v1364 = vmax.f32 %v1362, %v1363
        %v1365 = vrot.slane %v1364, 2
        %v1366 = vmax.f32 %v1364, %v1365
        %v1367 = vrot.slane %v1366, 1
        %v1368 = vmax.f32 %v1366, %v1367
        %v1369 = vmax.f32 %v1216, %v1219
        %v1370 = vrot.slane %v1369, 4
        %v1371 = vmax.f32 %v1369, %v1370
        %v1372 = vrot.slane %v1371, 2
        %v1373 = vmax.f32 %v1371, %v1372
        %v1374 = vrot.slane %v1373, 1
        %v1375 = vmax.f32 %v1373, %v1374
        %v1376 = vmax.f32 %v1217, %v1220
        %v1377 = vrot.slane %v1376, 4
        %v1378 = vmax.f32 %v1376, %v1377
        %v1379 = vrot.slane %v1378, 2
        %v1380 = vmax.f32 %v1378, %v1379
        %v1381 = vrot.slane %v1380, 1
        %v1382 = vmax.f32 %v1380, %v1381
        %v1383 = vmax.f32 %v1218, %v1221
        %v1384 = vrot.slane %v1383, 4
        %v1385 = vmax.f32 %v1383, %v1384
        %v1386 = vrot.slane %v1385, 2
        %v1387 = vmax.f32 %v1385, %v1386
        %v1388 = vrot.slane %v1387, 1
        %v1389 = vmax.f32 %v1387, %v1388
        %v1390 = vld [vmem:[#allocation2] sm:$0xff]
        %v1391 = vld [vmem:[#allocation2 + $0x8] sm:$0xff]
        %v1392 = vld [vmem:[#allocation2 + $0x10] sm:$0xff]
        %v1393 = vld [vmem:[#allocation2 + $0x18] sm:$0xff]
        %v1394 = vld [vmem:[#allocation2 + $0x20] sm:$0xff]
        %v1395 = vld [vmem:[#allocation2 + $0x28] sm:$0xff]
        %v1396 = vld [vmem:[#allocation2 + $0x30] sm:$0xff]
        %v1397 = vld [vmem:[#allocation2 + $0x38] sm:$0xff]
        %v1398 = vld [vmem:[#allocation2 + $0x40] sm:$0xff]
        %v1399 = vld [vmem:[#allocation2 + $0x48] sm:$0xff]
        %v1400 = vld [vmem:[#allocation2 + $0x50] sm:$0xff]
        %v1401 = vld [vmem:[#allocation2 + $0x58] sm:$0xff]
        %v1402 = vld [vmem:[#allocation2 + $0x60] sm:$0xff]
        %v1403 = vld [vmem:[#allocation2 + $0x68] sm:$0xff]
        %v1404 = vld [vmem:[#allocation2 + $0x70] sm:$0xff]
        %v1405 = vld [vmem:[#allocation2 + $0x78] sm:$0xff]
        %v1406 = vld [vmem:[#allocation2 + $0x80] sm:$0xff]
        %v1407 = vld [vmem:[#allocation2 + $0x88] sm:$0xff]
        %v1408 = vld [vmem:[#allocation2 + $0x90] sm:$0xff]
        %v1409 = vld [vmem:[#allocation2 + $0x98] sm:$0xff]
        %v1410 = vld [vmem:[#allocation2 + $0xa0] sm:$0xff]
        %v1411 = vld [vmem:[#allocation2 + $0xa8] sm:$0xff]
        %v1412 = vld [vmem:[#allocation2 + $0xb0] sm:$0xff]
        %v1413 = vld [vmem:[#allocation2 + $0xb8] sm:$0xff]
        %v1414 = vld [vmem:[#allocation2 + $0xc0] sm:$0xff]
        %v1415 = vld [vmem:[#allocation2 + $0xc8] sm:$0xff]
        %v1416 = vld [vmem:[#allocation2 + $0xd0] sm:$0xff]
        %v1417 = vld [vmem:[#allocation2 + $0xd8] sm:$0xff]
        %v1418 = vld [vmem:[#allocation2 + $0xe0] sm:$0xff]
        %v1419 = vld [vmem:[#allocation2 + $0xe8] sm:$0xff]
        %v1420 = vld [vmem:[#allocation2 + $0xf0] sm:$0xff]
        %v1421 = vld [vmem:[#allocation2 + $0xf8] sm:$0xff]
        %v1422 = vld [vmem:[#allocation2 + $0x100] sm:$0xff]
        %v1423 = vld [vmem:[#allocation2 + $0x108] sm:$0xff]
        %v1424 = vld [vmem:[#allocation2 + $0x110] sm:$0xff]
        %v1425 = vld [vmem:[#allocation2 + $0x118] sm:$0xff]
        %v1426 = vld [vmem:[#allocation2 + $0x120] sm:$0xff]
        %v1427 = vld [vmem:[#allocation2 + $0x128] sm:$0xff]
        %v1428 = vld [vmem:[#allocation2 + $0x130] sm:$0xff]
        %v1429 = vld [vmem:[#allocation2 + $0x138] sm:$0xff]
        %v1430 = vld [vmem:[#allocation2 + $0x140] sm:$0xff]
        %v1431 = vld [vmem:[#allocation2 + $0x148] sm:$0xff]
        %v1432 = vld [vmem:[#allocation2 + $0x150] sm:$0xff]
        %v1433 = vld [vmem:[#allocation2 + $0x158] sm:$0xff]
        %v1434 = vld [vmem:[#allocation2 + $0x160] sm:$0xff]
        %v1435 = vld [vmem:[#allocation2 + $0x168] sm:$0xff]
        %v1436 = vld [vmem:[#allocation2 + $0x170] sm:$0xff]
        %v1437 = vld [vmem:[#allocation2 + $0x178] sm:$0xff]
        %v1438 = vld [vmem:[%s4] sm:$0x1]
        %v1440 = vlaneseq
        %v1441 = vshrl.u32 %v1440, 7
        %v1442 = vsub.s32 0, %v1441
        %v1443 = vrot.slane %v1438, %v1442
        %vm1469 = vcmask 1041409
        %v1470 = vsel %vm1469, %v1249, %v1228
        %vm1471 = vcmask 1042434
        %v1472 = vsel %vm1471, %v1270, %v1470
        %vm1473 = vcmask 1043459
        %v1474 = vsel %vm1473, %v1291, %v1472
        %vm1475 = vcmask 1044484
        %v1476 = vsel %vm1475, %v1312, %v1474
        %vm1477 = vcmask 1045509
        %v1478 = vsel %vm1477, %v1333, %v1476
        %vm1479 = vcmask 1046534
        %v1480 = vsel %vm1479, %v1354, %v1478
        %vm1481 = vcmask 1047559
        %v1482 = vsel %vm1481, %v1375, %v1480
        %v1483 = vsel %vm1469, %v1256, %v1235
        %v1484 = vsel %vm1471, %v1277, %v1483
        %v1485 = vsel %vm1473, %v1298, %v1484
        %v1486 = vsel %vm1475, %v1319, %v1485
        %v1487 = vsel %vm1477, %v1340, %v1486
        %v1488 = vsel %vm1479, %v1361, %v1487
        %v1489 = vsel %vm1481, %v1382, %v1488
        %v1490 = vsel %vm1469, %v1263, %v1242
        %v1491 = vsel %vm1471, %v1284, %v1490
        %v1492 = vsel %vm1473, %v1305, %v1491
        %v1493 = vsel %vm1475, %v1326, %v1492
        %v1494 = vsel %vm1477, %v1347, %v1493
        %v1495 = vsel %vm1479, %v1368, %v1494
        %v1496 = vsel %vm1481, %v1389, %v1495
        %1500 = vmatprep.subr.mxu0 0.0
        %1501 = vmatpush1.msra.mxu0 %v1390
        %1502 = vmatprep.subr.mxu0 0.0
        %1503 = vmatpush1.msra.mxu0 %v1391
        %1504 = vmatprep.subr.mxu0 0.0
        %1505 = vmatpush1.msra.mxu0 %v1392
        %1506 = vmatprep.subr.mxu0 0.0
        %1507 = vmatpush1.msra.mxu0 %v1393
        %1508 = vmatprep.subr.mxu0 0.0
        %1509 = vmatpush1.msra.mxu0 %v1394
        %1510 = vmatprep.subr.mxu0 0.0
        %1511 = vmatpush1.msra.mxu0 %v1395
        %1512 = vmatprep.subr.mxu0 0.0
        %1513 = vmatpush1.msra.mxu0 %v1396
        %1514 = vmatprep.subr.mxu0 0.0
        %1515 = vmatpush1.msra.mxu0 %v1397
        %1516 = vmatprep.subr.mxu0 0.0
        %1517 = vmatpush1.msra.mxu0 %v1398
        %1518 = vmatprep.subr.mxu0 0.0
        %1519 = vmatpush1.msra.mxu0 %v1399
        %1520 = vmatprep.subr.mxu0 0.0
        %1521 = vmatpush1.msra.mxu0 %v1400
        %1522 = vmatprep.subr.mxu0 0.0
        %1523 = vmatpush1.msra.mxu0 %v1401
        %1524 = vmatprep.subr.mxu0 0.0
        %1525 = vmatpush1.msra.mxu0 %v1402
        %1526 = vmatprep.subr.mxu0 0.0
        %1527 = vmatpush1.msra.mxu0 %v1403
        %1528 = vmatprep.subr.mxu0 0.0
        %1529 = vmatpush1.msra.mxu0 %v1404
        %1530 = vmatprep.subr.mxu0 0.0
        %1531 = vmatpush1.msra.mxu0 %v1405
        %1532 = vmatprep.subr.mxu0 0.0
        %1533 = vmatpush1.msra.mxu0 %v1406
        %1534 = vmatprep.subr.mxu0 0.0
        %1535 = vmatpush1.msra.mxu0 %v1407
        %1536 = vmatprep.subr.mxu0 0.0
        %1537 = vmatpush1.msra.mxu0 %v1408
        %1538 = vmatprep.subr.mxu0 0.0
        %1539 = vmatpush1.msra.mxu0 %v1409
        %1540 = vmatprep.subr.mxu0 0.0
        %1541 = vmatpush1.msra.mxu0 %v1410
        %1542 = vmatprep.subr.mxu0 0.0
        %1543 = vmatpush1.msra.mxu0 %v1411
        %1544 = vmatprep.subr.mxu0 0.0
        %1545 = vmatpush1.msra.mxu0 %v1412
        %1546 = vmatprep.subr.mxu0 0.0
        %1547 = vmatpush1.msra.mxu0 %v1413
        %1548 = vmatprep.subr.mxu0 0.0
        %1549 = vmatpush1.msra.mxu0 %v1414
        %1550 = vmatprep.subr.mxu0 0.0
        %1551 = vmatpush1.msra.mxu0 %v1415
        %1552 = vmatprep.subr.mxu0 0.0
        %1553 = vmatpush1.msra.mxu0 %v1416
        %1554 = vmatprep.subr.mxu0 0.0
        %1555 = vmatpush1.msra.mxu0 %v1417
        %1556 = vmatprep.subr.mxu0 0.0
        %1557 = vmatpush1.msra.mxu0 %v1418
        %1558 = vmatprep.subr.mxu0 0.0
        %1559 = vmatpush1.msra.mxu0 %v1419
        %1560 = vmatprep.subr.mxu0 0.0
        %1561 = vmatpush1.msra.mxu0 %v1420
        %1562 = vmatprep.subr.mxu0 0.0
        %1563 = vmatpush1.msra.mxu0 %v1421
        %1564 = vmatprep.mubr.f32.mxu0 %v1489
        %1565 = vmatmul.mubr.f32.gmra.mrb[0].mxu0 %v1482
        %v1566 = vpop.f32.mrb[0].mxu0
        %v1567 = vadd.f32 %v1443, %v1566
        %v1568 = vpop.f32.mrb[0].mxu0
        %1569 = vdwg.mxu0
        %1570 = vmatprep.subr.mxu0 0.0
        %1571 = vmatpush1.msra.mxu0 %v1422
        %1572 = vmatprep.subr.mxu0 0.0
        %1573 = vmatpush1.msra.mxu0 %v1423
        %1574 = vmatprep.subr.mxu0 0.0
        %1575 = vmatpush1.msra.mxu0 %v1424
        %1576 = vmatprep.subr.mxu0 0.0
        %1577 = vmatpush1.msra.mxu0 %v1425
        %1578 = vmatprep.subr.mxu0 0.0
        %1579 = vmatpush1.msra.mxu0 %v1426
        %1580 = vmatprep.subr.mxu0 0.0
        %1581 = vmatpush1.msra.mxu0 %v1427
        %1582 = vmatprep.subr.mxu0 0.0
        %1583 = vmatpush1.msra.mxu0 %v1428
        %1584 = vmatprep.subr.mxu0 0.0
        %1585 = vmatpush1.msra.mxu0 %v1429
        %1586 = vmatprep.subr.mxu0 0.0
        %1587 = vmatpush1.msra.mxu0 %v1430
        %1588 = vmatprep.subr.mxu0 0.0
        %1589 = vmatpush1.msra.mxu0 %v1431
        %1590 = vmatprep.subr.mxu0 0.0
        %1591 = vmatpush1.msra.mxu0 %v1432
        %1592 = vmatprep.subr.mxu0 0.0
        %1593 = vmatpush1.msra.mxu0 %v1433
        %1594 = vmatprep.subr.mxu0 0.0
        %1595 = vmatpush1.msra.mxu0 %v1434
        %1596 = vmatprep.subr.mxu0 0.0
        %1597 = vmatpush1.msra.mxu0 %v1435
        %1598 = vmatprep.subr.mxu0 0.0
        %1599 = vmatpush1.msra.mxu0 %v1436
        %1600 = vmatprep.subr.mxu0 0.0
        %1601 = vmatpush1.msra.mxu0 %v1437
        %1602 = vmatprep.subr.mxu0 0.0
        %1603 = vmatpush1.msra.mxu0 0.0
        %1604 = vmatprep.subr.mxu0 0.0
        %1605 = vmatpush1.msra.mxu0 0.0
        %1606 = vmatprep.subr.mxu0 0.0
        %1607 = vmatpush1.msra.mxu0 0.0
        %1608 = vmatprep.subr.mxu0 0.0
        %1609 = vmatpush1.msra.mxu0 0.0
        %1610 = vmatprep.subr.mxu0 0.0
        %1611 = vmatpush1.msra.mxu0 0.0
        %1612 = vmatprep.subr.mxu0 0.0
        %1613 = vmatpush1.msra.mxu0 0.0
        %1614 = vmatprep.subr.mxu0 0.0
        %1615 = vmatpush1.msra.mxu0 0.0
        %1616 = vmatprep.subr.mxu0 0.0
        %1617 = vmatpush1.msra.mxu0 0.0
        %1618 = vmatprep.subr.mxu0 0.0
        %1619 = vmatpush1.msra.mxu0 0.0
        %1620 = vmatprep.subr.mxu0 0.0
        %1621 = vmatpush1.msra.mxu0 0.0
        %1622 = vmatprep.subr.mxu0 0.0
        %1623 = vmatpush1.msra.mxu0 0.0
        %1624 = vmatprep.subr.mxu0 0.0
        %1625 = vmatpush1.msra.mxu0 0.0
        %1626 = vmatprep.subr.mxu0 0.0
        %1627 = vmatpush1.msra.mxu0 0.0
        %1628 = vmatprep.subr.mxu0 0.0
        %1629 = vmatpush1.msra.mxu0 0.0
        %1630 = vmatprep.subr.mxu0 0.0
        %1631 = vmatpush1.msra.mxu0 0.0
        %1632 = vmatprep.subr.mxu0 0.0
        %1633 = vmatpush1.msra.mxu0 0.0
        %1634 = vmatprep.mubr.f32.mxu0 0.0
        %1635 = vmatmul.mubr.f32.gmra.mrb[0].mxu0 %v1496
        %v1636 = vpop.f32.mrb[0].mxu0
        %v1637 = vadd.f32 %v1567, %v1636
        %v1638 = vpop.f32.mrb[0].mxu0
        %1639 = vdwg.mxu0
        %1640 = vst [vmem:[%s235] sm:$0xff] %v1637
        %s1641 = sand.u32 %s138, 1
        %s1642 = scalar_lea.sflag [#allocation4], %s1641
        %s1643 = sand.u32 %s138, 1
        %s1644 = smul.addr %s1643, 8
        %s1645 = scalar_lea.vmem [#allocation5], %s1644
        // Predicated region
        $region45: #{tpu_custom_call.1} parent=39 // pred_check
          %p1646 = pneg %p148
        $region46: #{tpu_custom_call.1} parent=39 // pred_check_branch
          %1648 = sbr.rel (%p1646) target = $region48
        $region47: #{tpu_custom_call.1} parent=39 // pred_region
          %s1650 = ssub.s32 128, 128
          %1651 = vsyncadd %s1642, %s1650
          %s1652 = smul.addr %s20, 128
          %s1653 = scalar_lea.hbm %s5, %s1652
          %s1655 = sshll.u32 %s1645, 4
          %s1656 = int_to_ptr.vmem [resolvable:$true] %s1655
          %1658 = dma.vmem_to_hbm [thread:$0]  %s1656, 128, %s1653, %s1642
        $region48: #{tpu_custom_call.1} parent=39 // pred_fallthru
          _
      $region40: #{tpu_custom_call.1} parent=5 // pred_fallthru
        _
      %p1659 = scmp.le.s32.totalorder 2, %s15
      // Predicated region
      $region49: #{tpu_custom_call.1} parent=5 // pred_check
        %p1660 = pneg %p1659
      $region50: #{tpu_custom_call.1} parent=5 // pred_check_branch
        %1662 = sbr.rel (%p1660) target = $region52
      $region51: #{tpu_custom_call.1} parent=5 // pred_region
        %s1663 = ssub.s32 %s15, 2
        // Predicated region
        $region53: #{tpu_custom_call.1} parent=51 // pred_check
          %p1664 = pneg %p154
        $region54: #{tpu_custom_call.1} parent=51 // pred_check_branch
          %1666 = sbr.rel (%p1664) target = $region56
        $region55: #{tpu_custom_call.1} parent=51 // pred_region
          %s1667 = sand.u32 %s139, 1
          %s1668 = scalar_lea.sflag [#allocation4], %s1667
          %s1669 = sand.u32 %s139, 1
          %s1670 = smul.addr %s1669, 8
          %s1671 = scalar_lea.vmem [#allocation5], %s1670
          %1672 = dma.done %s1668, 128
        $region56: #{tpu_custom_call.1} parent=51 // pred_fallthru
          _
      $region52: #{tpu_custom_call.1} parent=5 // pred_fallthru
        _
    $region6: #{tpu_custom_call.1} parent=1 // loop_footer
      %s19 = sadd.s32 1, %s15
    $region7: #{tpu_custom_call.1} parent=1 // loop_footer_branch
      %14 = sbr.rel target = $region3
    $region8: #{tpu_custom_call.1} parent=1 // loop_exit
      _
    %1673 = vsyncpa [#allocation3], 1
    %s1674 = scalar_lea.sflag [#allocation3], 1
    %1675 = vsyncpa %s1674, 1
    %1676 = vsyncpa [#allocation4], 1
    %s1677 = scalar_lea.sflag [#allocation4], 1
    %1678 = vsyncpa %s1677, 1

</llo_original>
